<compile_context>
chip_gen: v7x
topology: tpu7x:2x2x1
jax: 0.10.0
libtpu: 0.0.40
codegen_flags: <defaults>
</compile_context>

<pallas_src>
import functools

import jax
import jax.numpy as jnp
from jax.experimental import pallas as pl
from jax.experimental.pallas import tpu as pltpu


# ------------------------------ small helpers -------------------------------

def _rup(n, m):
    return ((n + m - 1) // m) * m


def _pad2(x, rows, cols):
    return jnp.pad(x, ((0, rows - x.shape[0]), (0, cols - x.shape[1])))


def _full_spec(shape):
    # single-block spec: block == full array (no grid)
    return pl.BlockSpec(shape, lambda: (0,) * len(shape))


def _vmem_ceiling_bytes():
    """~80% of physical VMEM (usable ceiling); generation-aware via TpuInfo."""
    try:
        cap = int(pltpu.get_tpu_info().vmem_capacity_bytes)
    except Exception:
        cap = 64 * 1024 * 1024          # conservative (v7x-sized) fallback
    return int(cap * 0.8)


# ------------------------------ fused kernel --------------------------------

def fused_gcn_kernel(num_classes,
                     a_ref, xw1_ref, p_ref, invc_ref,
                     b1_ref, w2_ref, b2_ref,
                     w3_ref, b3_ref, w4_ref, b4_ref,
                     fc1w_ref, fc1b_ref, fc2w_ref, fc2b_ref,
                     o_ref):
    # A_norm stays resident in VMEM for all four conv layers.
    a = a_ref[...]                      # [Np, Np]  compute dtype (bf16)

    # ---- conv1: XW1 precomputed outside (F=3 -> skip padded contraction) ---
    ax = jnp.dot(a, xw1_ref[...], preferred_element_type=jnp.float32)
    h = jnp.maximum(ax + b1_ref[...], 0.0).astype(a.dtype)

    def conv(h, w_ref, b_ref):
        # Contract over the (smaller) hidden dim first: H @ W, then aggregate
        # with A.  f32 MXU accumulation, bias+ReLU+downcast fused in one pass.
        xw = jnp.dot(h, w_ref[...], preferred_element_type=jnp.float32)
        axw = jnp.dot(a, xw.astype(a.dtype), preferred_element_type=jnp.float32)
        return jnp.maximum(axw + b_ref[...], 0.0).astype(a.dtype)

    h = conv(h, w2_ref, b2_ref)
    h = conv(h, w3_ref, b3_ref)
    h = conv(h, w4_ref, b4_ref)

    # ---- exact global mean pool: one-hot sum (f32 acc) * f32 reciprocal ----
    pooled = jnp.dot(p_ref[...], h, preferred_element_type=jnp.float32)
    pooled = pooled * invc_ref[...]     # [Gp, Hp] * [Gp, 1]  (f32)

    # ---------------------------- FC head ----------------------------------
    z = jnp.dot(pooled.astype(a.dtype), fc1w_ref[...],
                preferred_element_type=jnp.float32) + fc1b_ref[...]
    z = jnp.maximum(z, 0.0)
    logits = jnp.dot(z.astype(a.dtype), fc2w_ref[...],
                     preferred_element_type=jnp.float32) + fc2b_ref[...]

    # mask padded class lanes so log_softmax spans only the real classes
    lane = jax.lax.broadcasted_iota(jnp.int32, logits.shape, 1)
    logits = jnp.where(lane < num_classes, logits, -jnp.inf)

    m = jnp.max(logits, axis=-1, keepdims=True)
    s = logits - m
    lse = jnp.log(jnp.sum(jnp.exp(s), axis=-1, keepdims=True))
    o_ref[...] = (s - lse).astype(o_ref.dtype)


# ------------------------------- glue (JAX) ---------------------------------

def build_normalized_adjacency_padded(edge_index, num_nodes, np_pad, dtype):
    """D^-1/2 (A + I) D^-1/2 built directly into the padded [Np, Np] buffer.

    Matches PyG gcn_norm with add_remaining_self_loops: existing self-loop
    edges are dropped, then identity is added on the real nodes (weight 1).
    """
    row, col = edge_index[0], edge_index[1]          # source, target
    w = jnp.where(row != col, 1.0, 0.0).astype(jnp.float32)
    a = jnp.zeros((np_pad, np_pad), jnp.float32)
    a = a.at[col, row].add(w)                        # A[target, source]
    diag = jnp.arange(np_pad)
    a = a.at[diag, diag].add(
        jnp.where(diag < num_nodes, 1.0, 0.0).astype(jnp.float32))
    deg = a.sum(axis=1)
    dinv = jnp.where(deg > 0, jax.lax.rsqrt(deg), 0.0)
    return (dinv[:, None] * a * dinv[None, :]).astype(dtype)


def build_onehot_pool_padded(batch, num_graphs, gp, np_pad, num_nodes, dtype):
    """Returns (P_onehot [gp, np_pad] in compute dtype, 1/counts [gp,1] f32)."""
    batch_p = jnp.full((np_pad,), -1, batch.dtype).at[:num_nodes].set(batch)
    onehot = (batch_p[None, :] == jnp.arange(gp, dtype=batch.dtype)[:, None])
    onehot = onehot.astype(jnp.float32)
    counts = onehot.sum(axis=1, keepdims=True)
    inv_counts = jnp.where(counts > 0, 1.0 / counts, 0.0).astype(jnp.float32)
    return onehot.astype(dtype), inv_counts


def prepare_padded_params(params, num_hidden, num_classes,
                          compute_dtype=jnp.bfloat16):
    """Pad + cast weights ONCE (outside the per-call path)."""
    hp = _rup(num_hidden, 128)
    cp = _rup(num_classes, 128)

    def wmat(name, r, c):
        return _pad2(params[name], r, c).astype(compute_dtype)

    def bvec(name, c):
        return _pad2(params[name], 1, c).astype(jnp.float32)

    return {
        # conv1_w stays unpadded f32: used for the tiny plain-JAX XW1 precompute
        "conv1_w_raw": params["conv1_w"].astype(jnp.float32),
        "b1": bvec("conv1_b", hp),
        "w2": wmat("conv2_w", hp, hp), "b2": bvec("conv2_b", hp),
        "w3": wmat("conv3_w", hp, hp), "b3": bvec("conv3_b", hp),
        "w4": wmat("conv4_w", hp, hp), "b4": bvec("conv4_b", hp),
        "fc1w": wmat("fc1_w", hp, hp), "fc1b": bvec("fc1_b", hp),
        "fc2w": wmat("fc2_w", hp, cp), "fc2b": bvec("fc2_b", cp),
    }


def fused_gcn_forward(padded, x, edge_index, batch, num_graphs, num_classes,
                      num_hidden, compute_dtype=jnp.bfloat16):
    n = x.shape[0]
    np_ = _rup(max(n, 8), 128)          # node count (lane dim of A and P)
    hp = _rup(num_hidden, 128)
    cp = _rup(num_classes, 128)
    gp = _rup(max(num_graphs, 1), 8)

    # adjacency built directly into the padded bf16 buffer (single cast)
    a_p = build_normalized_adjacency_padded(edge_index, n, np_, compute_dtype)

    # precompute XW1 in plain JAX (N x F @ F x H, F tiny) -> pad + cast once
    xw1 = jnp.dot(x.astype(jnp.float32), padded["conv1_w_raw"])
    xw1_p = _pad2(xw1, np_, hp).astype(compute_dtype)

    p_p, invc = build_onehot_pool_padded(batch, num_graphs, gp, np_, n,
                                         compute_dtype)

    args = [
        a_p, xw1_p, p_p, invc,
        padded["b1"],
        padded["w2"], padded["b2"],
        padded["w3"], padded["b3"],
        padded["w4"], padded["b4"],
        padded["fc1w"], padded["fc1b"],
        padded["fc2w"], padded["fc2b"],
    ]

    # ---- size-derived VMEM budget (2x headroom, per-generation ceiling) ----
    arg_bytes = sum(int(v.size) * v.dtype.itemsize for v in args)
    inter_bytes = np_ * hp * (2 + 4 + 4)      # H (bf16) + XW/AX f32 temporaries
    out_bytes = gp * cp * 4
    resident = arg_bytes + inter_bytes + out_bytes
    vmem_limit = min(_vmem_ceiling_bytes(), max(8 << 20, 2 * resident))
    # TODO(synk): if 2*resident > ceiling, fall back to a row-tiled per-layer
    # grid (parallel over A row blocks) instead of this fully resident kernel.

    # advisory cost estimate for XLA's scheduler
    flops = (4 * (2 * np_ * np_ * hp)          # A @ (XW) for 4 layers
             + 3 * (2 * np_ * hp * hp)         # H @ W for layers 2-4
             + 2 * gp * np_ * hp               # pool
             + 2 * gp * hp * hp + 2 * gp * hp * cp)   # fc1, fc2
    cost = pl.CostEstimate(flops=int(flops), transcendentals=int(gp * cp),
                           bytes_accessed=int(arg_bytes + out_bytes))

    out = pl.pallas_call(
        functools.partial(fused_gcn_kernel, num_classes),
        out_shape=jax.ShapeDtypeStruct((gp, cp), jnp.float32),
        in_specs=[_full_spec(v.shape) for v in args],
        out_specs=_full_spec((gp, cp)),
        compiler_params=pltpu.CompilerParams(vmem_limit_bytes=int(vmem_limit)),
        cost_estimate=cost,
    )(*args)

    # slice the real graphs / classes back out of the padded output
    return out[:num_graphs, :num_classes]


def init_params(key, num_features, num_classes, num_hidden):
    ks = jax.random.split(key, 12)

    def lin(kw, fan_in, fan_out):
        lim = 1.0 / jnp.sqrt(jnp.float32(fan_in))
        return jax.random.uniform(kw, (fan_in, fan_out), jnp.float32, -lim, lim)

    params = {}
    dims = [(num_features, num_hidden), (num_hidden, num_hidden),
            (num_hidden, num_hidden), (num_hidden, num_hidden)]
    for i, (fi, fo) in enumerate(dims, start=1):
        params[f"conv{i}_w"] = lin(ks[2 * i - 2], fi, fo)
        params[f"conv{i}_b"] = jax.random.uniform(
            ks[2 * i - 1], (1, fo), jnp.float32, -0.1, 0.1)
    params["fc1_w"] = lin(ks[8], num_hidden, num_hidden)
    params["fc1_b"] = jax.random.uniform(ks[9], (1, num_hidden), jnp.float32,
                                         -0.1, 0.1)
    params["fc2_w"] = lin(ks[10], num_hidden, num_classes)
    params["fc2_b"] = jax.random.uniform(ks[11], (1, num_classes), jnp.float32,
                                         -0.1, 0.1)
    return params


def gcn_forward(params, x, edge_index, batch, num_graphs, num_classes,
                num_hidden):
    padded = prepare_padded_params(params, num_hidden, num_classes)
    return fused_gcn_forward(padded, x, edge_index, batch, num_graphs,
                             num_classes, num_hidden)


# ---------------------------------- main ------------------------------------

if __name__ == "__main__":
    num_features, num_classes, num_hidden = 3, 4, 32
    num_nodes, num_graphs, num_edges = 16, 2, 24

    key = jax.random.PRNGKey(0)
    k_x, k_e, k_p = jax.random.split(key, 3)

    # node features [N, F]
    x = jax.random.normal(k_x, (num_nodes, num_features), jnp.float32)
    # random undirected edges (symmetrized), edge_index shape [2, 2E]
    src = jax.random.randint(k_e, (num_edges,), 0, num_nodes, jnp.int32)
    dst = jax.random.randint(jax.random.fold_in(k_e, 1), (num_edges,), 0,
                             num_nodes, jnp.int32)
    edge_index = jnp.stack([jnp.concatenate([src, dst]),
                            jnp.concatenate([dst, src])], axis=0)
    # batch vector: first 8 nodes -> graph 0, last 8 -> graph 1
    batch = jnp.concatenate([jnp.zeros(8, jnp.int32), jnp.ones(8, jnp.int32)])

    params = init_params(k_p, num_features, num_classes, num_hidden)

    out = gcn_forward(params, x, edge_index, batch, num_graphs, num_classes,
                      num_hidden)
    out = jax.block_until_ready(out)
    assert out.shape == (num_graphs, num_classes)
    # log_softmax rows must (log-)sum to ~1
    assert bool(jnp.allclose(jnp.exp(out).sum(-1), 1.0, atol=1e-4))
    print("KERNEL_OK")
</pallas_src>

<mosaic_0001>
module attributes {stable_mosaic.version = 11 : i64} {
  func.func @fused_gcn_kernel(%arg0: memref<128x128xbf16, #tpu.memory_space<vmem>>, %arg1: memref<128x128xbf16, #tpu.memory_space<vmem>>, %arg2: memref<8x128xbf16, #tpu.memory_space<vmem>>, %arg3: memref<8x1xf32, #tpu.memory_space<vmem>>, %arg4: memref<1x128xf32, #tpu.memory_space<vmem>>, %arg5: memref<128x128xbf16, #tpu.memory_space<vmem>>, %arg6: memref<1x128xf32, #tpu.memory_space<vmem>>, %arg7: memref<128x128xbf16, #tpu.memory_space<vmem>>, %arg8: memref<1x128xf32, #tpu.memory_space<vmem>>, %arg9: memref<128x128xbf16, #tpu.memory_space<vmem>>, %arg10: memref<1x128xf32, #tpu.memory_space<vmem>>, %arg11: memref<128x128xbf16, #tpu.memory_space<vmem>>, %arg12: memref<1x128xf32, #tpu.memory_space<vmem>>, %arg13: memref<128x128xbf16, #tpu.memory_space<vmem>>, %arg14: memref<1x128xf32, #tpu.memory_space<vmem>>, %arg15: memref<8x128xf32, #tpu.memory_space<vmem>>) attributes {dimension_semantics = [], scalar_prefetch = 0 : i64, scratch_operands = 0 : i64, tpu.core_type = #tpu.core_type<tc>} {
    %c0 = arith.constant 0 : index
    %c0_0 = arith.constant 0 : index
    %0 = vector.load %arg0[%c0, %c0_0] : memref<128x128xbf16, #tpu.memory_space<vmem>>, vector<128x128xbf16>
    %c0_1 = arith.constant 0 : index
    %c0_2 = arith.constant 0 : index
    %1 = vector.load %arg1[%c0_1, %c0_2] : memref<128x128xbf16, #tpu.memory_space<vmem>>, vector<128x128xbf16>
    %cst = arith.constant dense<0.000000e+00> : vector<128x128xf32>
    %2 = tpu.matmul %0, %1, %cst {dimension_numbers = #tpu.dot_dimension_numbers<[1], [0], [0], [1], [0, 0, 1, 1], [], []>} : vector<128x128xbf16>, vector<128x128xbf16>, vector<128x128xf32> -> vector<128x128xf32>
    %c0_3 = arith.constant 0 : index
    %c0_4 = arith.constant 0 : index
    %3 = vector.load %arg4[%c0_3, %c0_4] : memref<1x128xf32, #tpu.memory_space<vmem>>, vector<1x128xf32>
    %4 = vector.broadcast %3 : vector<1x128xf32> to vector<128x128xf32>
    %5 = arith.addf %2, %4 : vector<128x128xf32>
    %cst_5 = arith.constant 0.000000e+00 : f32
    %6 = vector.broadcast %cst_5 : f32 to vector<128x128xf32>
    %7 = arith.maximumf %5, %6 : vector<128x128xf32>
    %8 = arith.truncf %7 : vector<128x128xf32> to vector<128x128xbf16>
    %c0_6 = arith.constant 0 : index
    %c0_7 = arith.constant 0 : index
    %9 = vector.load %arg5[%c0_6, %c0_7] : memref<128x128xbf16, #tpu.memory_space<vmem>>, vector<128x128xbf16>
    %cst_8 = arith.constant dense<0.000000e+00> : vector<128x128xf32>
    %10 = tpu.matmul %8, %9, %cst_8 {dimension_numbers = #tpu.dot_dimension_numbers<[1], [0], [0], [1], [0, 0, 1, 1], [], []>} : vector<128x128xbf16>, vector<128x128xbf16>, vector<128x128xf32> -> vector<128x128xf32>
    %11 = arith.truncf %10 : vector<128x128xf32> to vector<128x128xbf16>
    %cst_9 = arith.constant dense<0.000000e+00> : vector<128x128xf32>
    %12 = tpu.matmul %0, %11, %cst_9 {dimension_numbers = #tpu.dot_dimension_numbers<[1], [0], [0], [1], [0, 0, 1, 1], [], []>} : vector<128x128xbf16>, vector<128x128xbf16>, vector<128x128xf32> -> vector<128x128xf32>
    %c0_10 = arith.constant 0 : index
    %c0_11 = arith.constant 0 : index
    %13 = vector.load %arg6[%c0_10, %c0_11] : memref<1x128xf32, #tpu.memory_space<vmem>>, vector<1x128xf32>
    %14 = vector.broadcast %13 : vector<1x128xf32> to vector<128x128xf32>
    %15 = arith.addf %12, %14 : vector<128x128xf32>
    %cst_12 = arith.constant 0.000000e+00 : f32
    %16 = vector.broadcast %cst_12 : f32 to vector<128x128xf32>
    %17 = arith.maximumf %15, %16 : vector<128x128xf32>
    %18 = arith.truncf %17 : vector<128x128xf32> to vector<128x128xbf16>
    %c0_13 = arith.constant 0 : index
    %c0_14 = arith.constant 0 : index
    %19 = vector.load %arg7[%c0_13, %c0_14] : memref<128x128xbf16, #tpu.memory_space<vmem>>, vector<128x128xbf16>
    %cst_15 = arith.constant dense<0.000000e+00> : vector<128x128xf32>
    %20 = tpu.matmul %18, %19, %cst_15 {dimension_numbers = #tpu.dot_dimension_numbers<[1], [0], [0], [1], [0, 0, 1, 1], [], []>} : vector<128x128xbf16>, vector<128x128xbf16>, vector<128x128xf32> -> vector<128x128xf32>
    %21 = arith.truncf %20 : vector<128x128xf32> to vector<128x128xbf16>
    %cst_16 = arith.constant dense<0.000000e+00> : vector<128x128xf32>
    %22 = tpu.matmul %0, %21, %cst_16 {dimension_numbers = #tpu.dot_dimension_numbers<[1], [0], [0], [1], [0, 0, 1, 1], [], []>} : vector<128x128xbf16>, vector<128x128xbf16>, vector<128x128xf32> -> vector<128x128xf32>
    %c0_17 = arith.constant 0 : index
    %c0_18 = arith.constant 0 : index
    %23 = vector.load %arg8[%c0_17, %c0_18] : memref<1x128xf32, #tpu.memory_space<vmem>>, vector<1x128xf32>
    %24 = vector.broadcast %23 : vector<1x128xf32> to vector<128x128xf32>
    %25 = arith.addf %22, %24 : vector<128x128xf32>
    %cst_19 = arith.constant 0.000000e+00 : f32
    %26 = vector.broadcast %cst_19 : f32 to vector<128x128xf32>
    %27 = arith.maximumf %25, %26 : vector<128x128xf32>
    %28 = arith.truncf %27 : vector<128x128xf32> to vector<128x128xbf16>
    %c0_20 = arith.constant 0 : index
    %c0_21 = arith.constant 0 : index
    %29 = vector.load %arg9[%c0_20, %c0_21] : memref<128x128xbf16, #tpu.memory_space<vmem>>, vector<128x128xbf16>
    %cst_22 = arith.constant dense<0.000000e+00> : vector<128x128xf32>
    %30 = tpu.matmul %28, %29, %cst_22 {dimension_numbers = #tpu.dot_dimension_numbers<[1], [0], [0], [1], [0, 0, 1, 1], [], []>} : vector<128x128xbf16>, vector<128x128xbf16>, vector<128x128xf32> -> vector<128x128xf32>
    %31 = arith.truncf %30 : vector<128x128xf32> to vector<128x128xbf16>
    %cst_23 = arith.constant dense<0.000000e+00> : vector<128x128xf32>
    %32 = tpu.matmul %0, %31, %cst_23 {dimension_numbers = #tpu.dot_dimension_numbers<[1], [0], [0], [1], [0, 0, 1, 1], [], []>} : vector<128x128xbf16>, vector<128x128xbf16>, vector<128x128xf32> -> vector<128x128xf32>
    %c0_24 = arith.constant 0 : index
    %c0_25 = arith.constant 0 : index
    %33 = vector.load %arg10[%c0_24, %c0_25] : memref<1x128xf32, #tpu.memory_space<vmem>>, vector<1x128xf32>
    %34 = vector.broadcast %33 : vector<1x128xf32> to vector<128x128xf32>
    %35 = arith.addf %32, %34 : vector<128x128xf32>
    %cst_26 = arith.constant 0.000000e+00 : f32
    %36 = vector.broadcast %cst_26 : f32 to vector<128x128xf32>
    %37 = arith.maximumf %35, %36 : vector<128x128xf32>
    %38 = arith.truncf %37 : vector<128x128xf32> to vector<128x128xbf16>
    %c0_27 = arith.constant 0 : index
    %c0_28 = arith.constant 0 : index
    %39 = vector.load %arg2[%c0_27, %c0_28] : memref<8x128xbf16, #tpu.memory_space<vmem>>, vector<8x128xbf16>
    %cst_29 = arith.constant dense<0.000000e+00> : vector<8x128xf32>
    %40 = tpu.matmul %39, %38, %cst_29 {dimension_numbers = #tpu.dot_dimension_numbers<[1], [0], [0], [1], [0, 0, 1, 1], [], []>} : vector<8x128xbf16>, vector<128x128xbf16>, vector<8x128xf32> -> vector<8x128xf32>
    %c0_30 = arith.constant 0 : index
    %c0_31 = arith.constant 0 : index
    %41 = vector.load %arg3[%c0_30, %c0_31] : memref<8x1xf32, #tpu.memory_space<vmem>>, vector<8x1xf32>
    %42 = vector.broadcast %41 : vector<8x1xf32> to vector<8x128xf32>
    %43 = arith.mulf %40, %42 : vector<8x128xf32>
    %44 = arith.truncf %43 : vector<8x128xf32> to vector<8x128xbf16>
    %c0_32 = arith.constant 0 : index
    %c0_33 = arith.constant 0 : index
    %45 = vector.load %arg11[%c0_32, %c0_33] : memref<128x128xbf16, #tpu.memory_space<vmem>>, vector<128x128xbf16>
    %cst_34 = arith.constant dense<0.000000e+00> : vector<8x128xf32>
    %46 = tpu.matmul %44, %45, %cst_34 {dimension_numbers = #tpu.dot_dimension_numbers<[1], [0], [0], [1], [0, 0, 1, 1], [], []>} : vector<8x128xbf16>, vector<128x128xbf16>, vector<8x128xf32> -> vector<8x128xf32>
    %c0_35 = arith.constant 0 : index
    %c0_36 = arith.constant 0 : index
    %47 = vector.load %arg12[%c0_35, %c0_36] : memref<1x128xf32, #tpu.memory_space<vmem>>, vector<1x128xf32>
    %48 = vector.broadcast %47 : vector<1x128xf32> to vector<8x128xf32>
    %49 = arith.addf %46, %48 : vector<8x128xf32>
    %cst_37 = arith.constant 0.000000e+00 : f32
    %50 = vector.broadcast %cst_37 : f32 to vector<8x128xf32>
    %51 = arith.maximumf %49, %50 : vector<8x128xf32>
    %52 = arith.truncf %51 : vector<8x128xf32> to vector<8x128xbf16>
    %c0_38 = arith.constant 0 : index
    %c0_39 = arith.constant 0 : index
    %53 = vector.load %arg13[%c0_38, %c0_39] : memref<128x128xbf16, #tpu.memory_space<vmem>>, vector<128x128xbf16>
    %cst_40 = arith.constant dense<0.000000e+00> : vector<8x128xf32>
    %54 = tpu.matmul %52, %53, %cst_40 {dimension_numbers = #tpu.dot_dimension_numbers<[1], [0], [0], [1], [0, 0, 1, 1], [], []>} : vector<8x128xbf16>, vector<128x128xbf16>, vector<8x128xf32> -> vector<8x128xf32>
    %c0_41 = arith.constant 0 : index
    %c0_42 = arith.constant 0 : index
    %55 = vector.load %arg14[%c0_41, %c0_42] : memref<1x128xf32, #tpu.memory_space<vmem>>, vector<1x128xf32>
    %56 = vector.broadcast %55 : vector<1x128xf32> to vector<8x128xf32>
    %57 = arith.addf %54, %56 : vector<8x128xf32>
    %58 = tpu.iota {dimensions = array<i32: 1>} : vector<8x128xi32>
    %c4_i32 = arith.constant 4 : i32
    %59 = vector.broadcast %c4_i32 : i32 to vector<8x128xi32>
    %60 = arith.cmpi slt, %58, %59 : vector<8x128xi32>
    %cst_43 = arith.constant 0xFF800000 : f32
    %61 = vector.broadcast %cst_43 : f32 to vector<8x128xf32>
    %62 = arith.select %60, %57, %61 : vector<8x128xi1>, vector<8x128xf32>
    %cst_44 = arith.constant dense<0xFF800000> : vector<8xf32>
    %63 = vector.multi_reduction <maximumf>, %62, %cst_44 [1] : vector<8x128xf32> to vector<8xf32>
    %64 = vector.shape_cast %63 : vector<8xf32> to vector<8x1xf32>
    %65 = vector.broadcast %64 : vector<8x1xf32> to vector<8x128xf32>
    %66 = arith.subf %62, %65 : vector<8x128xf32>
    %67 = math.exp %66 : vector<8x128xf32>
    %cst_45 = arith.constant dense<0.000000e+00> : vector<8xf32>
    %68 = vector.multi_reduction <add>, %67, %cst_45 [1] : vector<8x128xf32> to vector<8xf32>
    %69 = vector.shape_cast %68 : vector<8xf32> to vector<8x1xf32>
    %70 = math.log %69 : vector<8x1xf32>
    %71 = vector.broadcast %70 : vector<8x1xf32> to vector<8x128xf32>
    %72 = arith.subf %66, %71 : vector<8x128xf32>
    %c0_46 = arith.constant 0 : index
    %c0_47 = arith.constant 0 : index
    %73 = vector.load %arg15[%c0_46, %c0_47] : memref<8x128xf32, #tpu.memory_space<vmem>>, vector<8x128xf32>
    tpu.vector_store %arg15[%c0_46, %c0_47], %72 {strides = array<i32>} : memref<8x128xf32, #tpu.memory_space<vmem>>, vector<8x128xf32>,
    return
  }
}

</mosaic_0001>

<llo_original>
// kernel: tpu_custom_call.1
$region0: #{tpu_custom_call.1}
  #allocation0 [shape = 'u32[]', space=smem, size = 0x4, offset = 0x4, fixed_abs, tag = 'smem constant byte address 0x4 - core index']
  #allocation1 [shape = 'u32[144,128]{1,0:T(1,128)}', space=vmem, size = 0x12000, scoped, tag = 'internal scratch']
  %s0 = inlined_call_operand.hbm [shape: bf16[128,128], index: 0, kind: input, shape index: {}]
  %s1 = inlined_call_operand.hbm [shape: bf16[128,128], index: 1, kind: input, shape index: {}]
  %s2 = inlined_call_operand.vmem [shape: bf16[8,128], index: 2, kind: input, shape index: {}]
  %s3 = inlined_call_operand.vmem [shape: f32[8,1], index: 3, kind: input, shape index: {}]
  %s4 = inlined_call_operand.vmem [shape: f32[1,128], index: 4, kind: input, shape index: {}]
  %s5 = inlined_call_operand.hbm [shape: bf16[128,128], index: 5, kind: input, shape index: {}]
  %s6 = inlined_call_operand.vmem [shape: f32[1,128], index: 6, kind: input, shape index: {}]
  %s7 = inlined_call_operand.hbm [shape: bf16[128,128], index: 7, kind: input, shape index: {}]
  %s8 = inlined_call_operand.vmem [shape: f32[1,128], index: 8, kind: input, shape index: {}]
  %s9 = inlined_call_operand.hbm [shape: bf16[128,128], index: 9, kind: input, shape index: {}]
  %s10 = inlined_call_operand.vmem [shape: f32[1,128], index: 10, kind: input, shape index: {}]
  %s11 = inlined_call_operand.hbm [shape: bf16[128,128], index: 11, kind: input, shape index: {}]
  %s12 = inlined_call_operand.vmem [shape: f32[1,128], index: 12, kind: input, shape index: {}]
  %s13 = inlined_call_operand.hbm [shape: bf16[128,128], index: 13, kind: input, shape index: {}]
  %s14 = inlined_call_operand.vmem [shape: f32[1,128], index: 14, kind: input, shape index: {}]
  %s15 = inlined_call_operand.hbm [shape: f32[8,128], index: 15, kind: output, shape index: {}]
  %s16 = sld [smem:[#allocation0]]
  $region98: #{tpu_custom_call.1} parent=0
    _
  %s18 = ssub.s32 1, %s16
  %s19 = scalar_select 0, %s18, %s16
  $region1: #{tpu_custom_call.1} parent=0
    #allocation2 [shape = 'u8[32768]{0}', space=vmem, size = 0x8000, scoped, tag = 'input window, operand 0, single buffered']
    #allocation3 [shape = 's32[1]{0}', space=sflag, size = 0x4, scoped, tag = 'scoped memory for tpu_custom_call.1']
    #allocation4 [shape = 's32[1]{0}', space=sflag, size = 0x4, scoped, tag = 'scoped memory for tpu_custom_call.1']
    #allocation5 [shape = 'u8[32768]{0}', space=vmem, size = 0x8000, scoped, tag = 'input window, operand 1, single buffered']
    #allocation6 [shape = 's32[1]{0}', space=sflag, size = 0x4, scoped, tag = 'scoped memory for tpu_custom_call.1']
    #allocation7 [shape = 'u8[32768]{0}', space=vmem, size = 0x8000, scoped, tag = 'input window, operand 5, single buffered']
    #allocation8 [shape = 'u8[32768]{0}', space=vmem, size = 0x8000, scoped, tag = 'input window, operand 7, single buffered']
    #allocation9 [shape = 's32[1]{0}', space=sflag, size = 0x4, scoped, tag = 'scoped memory for tpu_custom_call.1']
    #allocation10 [shape = 'u8[32768]{0}', space=vmem, size = 0x8000, scoped, tag = 'input window, operand 9, single buffered']
    #allocation11 [shape = 'u8[32768]{0}', space=vmem, size = 0x8000, scoped, tag = 'input window, operand 11, single buffered']
    #allocation12 [shape = 's32[1]{0}', space=sflag, size = 0x4, scoped, tag = 'scoped memory for tpu_custom_call.1']
    #allocation13 [shape = 'u8[32768]{0}', space=vmem, size = 0x8000, scoped, tag = 'input window, operand 13, single buffered']
    #allocation14 [shape = 'u8[4096]{0}', space=vmem, size = 0x1000, scoped, tag = 'output window, operand 0, single buffered']
    %20 = vsyncpa [#allocation3], 0
    %21 = vsyncpa [#allocation6], 0
    %22 = vsyncpa [#allocation9], 0
    %23 = vsyncpa [#allocation12], 0
    %24 = vsyncpa [#allocation4], 0
    // Predicated region
    $region2: #{tpu_custom_call.1} parent=1 // pred_check
      _
    $region3: #{tpu_custom_call.1} parent=1 // pred_check_branch
      %26 = sbr.rel (0) target = $region5
    $region4: #{tpu_custom_call.1} parent=1 // pred_region
      %s28 = ssub.s32 1024, 1024
      %29 = vsyncadd [#allocation3], %s28
      %s30 = sshll.u32 [#allocation2], 4
      %s31 = int_to_ptr.vmem [resolvable:$true] %s30
      %36 = dma.hbm_to_vmem [thread:$0]  %s0, 1024, %s31, [#allocation3], 64, 64, 4
    $region5: #{tpu_custom_call.1} parent=1 // pred_fallthru
      _
    // Predicated region
    $region6: #{tpu_custom_call.1} parent=1 // pred_check
      _
    $region7: #{tpu_custom_call.1} parent=1 // pred_check_branch
      %38 = sbr.rel (0) target = $region9
    $region8: #{tpu_custom_call.1} parent=1 // pred_region
      %s40 = ssub.s32 1024, 1024
      %41 = vsyncadd [#allocation6], %s40
      %s42 = sshll.u32 [#allocation5], 4
      %s43 = int_to_ptr.vmem [resolvable:$true] %s42
      %48 = dma.hbm_to_vmem [thread:$0]  %s1, 1024, %s43, [#allocation6], 64, 64, 4
    $region9: #{tpu_custom_call.1} parent=1 // pred_fallthru
      _
    // Predicated region
    $region10: #{tpu_custom_call.1} parent=1 // pred_check
      _
    $region11: #{tpu_custom_call.1} parent=1 // pred_check_branch
      %50 = sbr.rel (0) target = $region13
    $region12: #{tpu_custom_call.1} parent=1 // pred_region
      _
    $region13: #{tpu_custom_call.1} parent=1 // pred_fallthru
      _
    // Predicated region
    $region14: #{tpu_custom_call.1} parent=1 // pred_check
      _
    $region15: #{tpu_custom_call.1} parent=1 // pred_check_branch
      %52 = sbr.rel (0) target = $region17
    $region16: #{tpu_custom_call.1} parent=1 // pred_region
      _
    $region17: #{tpu_custom_call.1} parent=1 // pred_fallthru
      _
    // Predicated region
    $region18: #{tpu_custom_call.1} parent=1 // pred_check
      _
    $region19: #{tpu_custom_call.1} parent=1 // pred_check_branch
      %54 = sbr.rel (0) target = $region21
    $region20: #{tpu_custom_call.1} parent=1 // pred_region
      _
    $region21: #{tpu_custom_call.1} parent=1 // pred_fallthru
      _
    // Predicated region
    $region22: #{tpu_custom_call.1} parent=1 // pred_check
      _
    $region23: #{tpu_custom_call.1} parent=1 // pred_check_branch
      %56 = sbr.rel (0) target = $region25
    $region24: #{tpu_custom_call.1} parent=1 // pred_region
      %s58 = ssub.s32 1024, 1024
      %59 = vsyncadd [#allocation6], %s58
      %s60 = sshll.u32 [#allocation7], 4
      %s61 = int_to_ptr.vmem [resolvable:$true] %s60
      %66 = dma.hbm_to_vmem [thread:$0]  %s5, 1024, %s61, [#allocation6], 64, 64, 4
    $region25: #{tpu_custom_call.1} parent=1 // pred_fallthru
      _
    // Predicated region
    $region26: #{tpu_custom_call.1} parent=1 // pred_check
      _
    $region27: #{tpu_custom_call.1} parent=1 // pred_check_branch
      %68 = sbr.rel (0) target = $region29
    $region28: #{tpu_custom_call.1} parent=1 // pred_region
      _
    $region29: #{tpu_custom_call.1} parent=1 // pred_fallthru
      _
    // Predicated region
    $region30: #{tpu_custom_call.1} parent=1 // pred_check
      _
    $region31: #{tpu_custom_call.1} parent=1 // pred_check_branch
      %70 = sbr.rel (0) target = $region33
    $region32: #{tpu_custom_call.1} parent=1 // pred_region
      %s72 = ssub.s32 1024, 1024
      %73 = vsyncadd [#allocation9], %s72
      %s74 = sshll.u32 [#allocation8], 4
      %s75 = int_to_ptr.vmem [resolvable:$true] %s74
      %80 = dma.hbm_to_vmem [thread:$0]  %s7, 1024, %s75, [#allocation9], 64, 64, 4
    $region33: #{tpu_custom_call.1} parent=1 // pred_fallthru
      _
    // Predicated region
    $region34: #{tpu_custom_call.1} parent=1 // pred_check
      _
    $region35: #{tpu_custom_call.1} parent=1 // pred_check_branch
      %82 = sbr.rel (0) target = $region37
    $region36: #{tpu_custom_call.1} parent=1 // pred_region
      _
    $region37: #{tpu_custom_call.1} parent=1 // pred_fallthru
      _
    // Predicated region
    $region38: #{tpu_custom_call.1} parent=1 // pred_check
      _
    $region39: #{tpu_custom_call.1} parent=1 // pred_check_branch
      %84 = sbr.rel (0) target = $region41
    $region40: #{tpu_custom_call.1} parent=1 // pred_region
      %s86 = ssub.s32 1024, 1024
      %87 = vsyncadd [#allocation9], %s86
      %s88 = sshll.u32 [#allocation10], 4
      %s89 = int_to_ptr.vmem [resolvable:$true] %s88
      %94 = dma.hbm_to_vmem [thread:$0]  %s9, 1024, %s89, [#allocation9], 64, 64, 4
    $region41: #{tpu_custom_call.1} parent=1 // pred_fallthru
      _
    // Predicated region
    $region42: #{tpu_custom_call.1} parent=1 // pred_check
      _
    $region43: #{tpu_custom_call.1} parent=1 // pred_check_branch
      %96 = sbr.rel (0) target = $region45
    $region44: #{tpu_custom_call.1} parent=1 // pred_region
      _
    $region45: #{tpu_custom_call.1} parent=1 // pred_fallthru
      _
    // Predicated region
    $region46: #{tpu_custom_call.1} parent=1 // pred_check
      _
    $region47: #{tpu_custom_call.1} parent=1 // pred_check_branch
      %98 = sbr.rel (0) target = $region49
    $region48: #{tpu_custom_call.1} parent=1 // pred_region
      %s100 = ssub.s32 1024, 1024
      %101 = vsyncadd [#allocation12], %s100
      %s102 = sshll.u32 [#allocation11], 4
      %s103 = int_to_ptr.vmem [resolvable:$true] %s102
      %108 = dma.hbm_to_vmem [thread:$0]  %s11, 1024, %s103, [#allocation12], 64, 64, 4
    $region49: #{tpu_custom_call.1} parent=1 // pred_fallthru
      _
    // Predicated region
    $region50: #{tpu_custom_call.1} parent=1 // pred_check
      _
    $region51: #{tpu_custom_call.1} parent=1 // pred_check_branch
      %110 = sbr.rel (0) target = $region53
    $region52: #{tpu_custom_call.1} parent=1 // pred_region
      _
    $region53: #{tpu_custom_call.1} parent=1 // pred_fallthru
      _
    // Predicated region
    $region54: #{tpu_custom_call.1} parent=1 // pred_check
      _
    $region55: #{tpu_custom_call.1} parent=1 // pred_check_branch
      %112 = sbr.rel (0) target = $region57
    $region56: #{tpu_custom_call.1} parent=1 // pred_region
      %s114 = ssub.s32 1024, 1024
      %115 = vsyncadd [#allocation12], %s114
      %s116 = sshll.u32 [#allocation13], 4
      %s117 = int_to_ptr.vmem [resolvable:$true] %s116
      %122 = dma.hbm_to_vmem [thread:$0]  %s13, 1024, %s117, [#allocation12], 64, 64, 4
    $region57: #{tpu_custom_call.1} parent=1 // pred_fallthru
      _
    // Predicated region
    $region58: #{tpu_custom_call.1} parent=1 // pred_check
      _
    $region59: #{tpu_custom_call.1} parent=1 // pred_check_branch
      %124 = sbr.rel (0) target = $region61
    $region60: #{tpu_custom_call.1} parent=1 // pred_region
      _
    $region61: #{tpu_custom_call.1} parent=1 // pred_fallthru
      _
    // Predicated region
    $region62: #{tpu_custom_call.1} parent=1 // pred_check
      _
    $region63: #{tpu_custom_call.1} parent=1 // pred_check_branch
      %126 = sbr.rel (0) target = $region65
    $region64: #{tpu_custom_call.1} parent=1 // pred_region
      %127 = dma.done [#allocation3], 1024
    $region65: #{tpu_custom_call.1} parent=1 // pred_fallthru
      _
    // Predicated region
    $region66: #{tpu_custom_call.1} parent=1 // pred_check
      _
    $region67: #{tpu_custom_call.1} parent=1 // pred_check_branch
      %129 = sbr.rel (0) target = $region69
    $region68: #{tpu_custom_call.1} parent=1 // pred_region
      %130 = dma.done [#allocation6], 1024
    $region69: #{tpu_custom_call.1} parent=1 // pred_fallthru
      _
    // Predicated region
    $region70: #{tpu_custom_call.1} parent=1 // pred_check
      _
    $region71: #{tpu_custom_call.1} parent=1 // pred_check_branch
      %132 = sbr.rel (0) target = $region73
    $region72: #{tpu_custom_call.1} parent=1 // pred_region
      %133 = dma.done [#allocation6], 1024
    $region73: #{tpu_custom_call.1} parent=1 // pred_fallthru
      _
    // Predicated region
    $region74: #{tpu_custom_call.1} parent=1 // pred_check
      _
    $region75: #{tpu_custom_call.1} parent=1 // pred_check_branch
      %135 = sbr.rel (0) target = $region77
    $region76: #{tpu_custom_call.1} parent=1 // pred_region
      %136 = dma.done [#allocation9], 1024
    $region77: #{tpu_custom_call.1} parent=1 // pred_fallthru
      _
    // Predicated region
    $region78: #{tpu_custom_call.1} parent=1 // pred_check
      _
    $region79: #{tpu_custom_call.1} parent=1 // pred_check_branch
      %138 = sbr.rel (0) target = $region81
    $region80: #{tpu_custom_call.1} parent=1 // pred_region
      %139 = dma.done [#allocation9], 1024
    $region81: #{tpu_custom_call.1} parent=1 // pred_fallthru
      _
    // Predicated region
    $region82: #{tpu_custom_call.1} parent=1 // pred_check
      _
    $region83: #{tpu_custom_call.1} parent=1 // pred_check_branch
      %141 = sbr.rel (0) target = $region85
    $region84: #{tpu_custom_call.1} parent=1 // pred_region
      %142 = dma.done [#allocation12], 1024
    $region85: #{tpu_custom_call.1} parent=1 // pred_fallthru
      _
    // Predicated region
    $region86: #{tpu_custom_call.1} parent=1 // pred_check
      _
    $region87: #{tpu_custom_call.1} parent=1 // pred_check_branch
      %144 = sbr.rel (0) target = $region89
    $region88: #{tpu_custom_call.1} parent=1 // pred_region
      %145 = dma.done [#allocation12], 1024
    $region89: #{tpu_custom_call.1} parent=1 // pred_fallthru
      _
    %v147 = vld [vmem:[#allocation2] sm:$0xf]
    %v148 = vld [vmem:[#allocation2 + $0x4] sm:$0xf]
    %v149 = vld [vmem:[#allocation2 + $0x8] sm:$0xf]
    %v150 = vld [vmem:[#allocation2 + $0xc] sm:$0xf]
    %v151 = vld [vmem:[#allocation2 + $0x10] sm:$0xf]
    %v152 = vld [vmem:[#allocation2 + $0x14] sm:$0xf]
    %v153 = vld [vmem:[#allocation2 + $0x18] sm:$0xf]
    %v154 = vld [vmem:[#allocation2 + $0x1c] sm:$0xf]
    %v155 = vld [vmem:[#allocation2 + $0x20] sm:$0xf]
    %v156 = vld [vmem:[#allocation2 + $0x24] sm:$0xf]
    %v157 = vld [vmem:[#allocation2 + $0x28] sm:$0xf]
    %v158 = vld [vmem:[#allocation2 + $0x2c] sm:$0xf]
    %v159 = vld [vmem:[#allocation2 + $0x30] sm:$0xf]
    %v160 = vld [vmem:[#allocation2 + $0x34] sm:$0xf]
    %v161 = vld [vmem:[#allocation2 + $0x38] sm:$0xf]
    %v162 = vld [vmem:[#allocation2 + $0x3c] sm:$0xf]
    %v163 = vld [vmem:[#allocation5] sm:$0xf]
    %v164 = vld [vmem:[#allocation5 + $0x4] sm:$0xf]
    %v165 = vld [vmem:[#allocation5 + $0x8] sm:$0xf]
    %v166 = vld [vmem:[#allocation5 + $0xc] sm:$0xf]
    %v167 = vld [vmem:[#allocation5 + $0x10] sm:$0xf]
    %v168 = vld [vmem:[#allocation5 + $0x14] sm:$0xf]
    %v169 = vld [vmem:[#allocation5 + $0x18] sm:$0xf]
    %v170 = vld [vmem:[#allocation5 + $0x1c] sm:$0xf]
    %v171 = vld [vmem:[#allocation5 + $0x20] sm:$0xf]
    %v172 = vld [vmem:[#allocation5 + $0x24] sm:$0xf]
    %v173 = vld [vmem:[#allocation5 + $0x28] sm:$0xf]
    %v174 = vld [vmem:[#allocation5 + $0x2c] sm:$0xf]
    %v175 = vld [vmem:[#allocation5 + $0x30] sm:$0xf]
    %v176 = vld [vmem:[#allocation5 + $0x34] sm:$0xf]
    %v177 = vld [vmem:[#allocation5 + $0x38] sm:$0xf]
    %v178 = vld [vmem:[#allocation5 + $0x3c] sm:$0xf]
    %v179 = vld [vmem:[%s4] sm:$0x1]
    %v181 = vlaneseq
    %v182 = vshrl.u32 %v181, 7
    %v183 = vsub.s32 0, %v182
    %v184 = vrot.slane %v179, %v183
    %v202 = vunpack.c.l.b16 %v147
    %v203 = vunpack.c.l.b16 %v148
    %v204 = vunpack.c.l.b16 %v149
    %v205 = vunpack.c.l.b16 %v150
    %v206 = vunpack.c.l.b16 %v151
    %v207 = vunpack.c.l.b16 %v152
    %v208 = vunpack.c.l.b16 %v153
    %v209 = vunpack.c.l.b16 %v154
    %v210 = vunpack.c.l.b16 %v155
    %v211 = vunpack.c.l.b16 %v156
    %v212 = vunpack.c.l.b16 %v157
    %v213 = vunpack.c.l.b16 %v158
    %v214 = vunpack.c.l.b16 %v159
    %v215 = vunpack.c.l.b16 %v160
    %v216 = vunpack.c.l.b16 %v161
    %v217 = vunpack.c.l.b16 %v162
    %v218 = vpack.c.b16 %v203, %v202
    %v219 = vpack.c.b16 %v205, %v204
    %v220 = vpack.c.b16 %v207, %v206
    %v221 = vpack.c.b16 %v209, %v208
    %v222 = vpack.c.b16 %v211, %v210
    %v223 = vpack.c.b16 %v213, %v212
    %v224 = vpack.c.b16 %v215, %v214
    %v225 = vpack.c.b16 %v217, %v216
    %v250 = vunpack.c.l.b16 %v163
    %v251 = vunpack.c.l.b16 %v164
    %v252 = vunpack.c.l.b16 %v165
    %v253 = vunpack.c.l.b16 %v166
    %v254 = vunpack.c.l.b16 %v167
    %v255 = vunpack.c.l.b16 %v168
    %v256 = vunpack.c.l.b16 %v169
    %v257 = vunpack.c.l.b16 %v170
    %v258 = vunpack.c.l.b16 %v171
    %v259 = vunpack.c.l.b16 %v172
    %v260 = vunpack.c.l.b16 %v173
    %v261 = vunpack.c.l.b16 %v174
    %v262 = vunpack.c.l.b16 %v175
    %v263 = vunpack.c.l.b16 %v176
    %v264 = vunpack.c.l.b16 %v177
    %v265 = vunpack.c.l.b16 %v178
    %v266 = vpack.c.b16 %v251, %v250
    %v267 = vpack.c.b16 %v253, %v252
    %v268 = vpack.c.b16 %v255, %v254
    %v269 = vpack.c.b16 %v257, %v256
    %v270 = vpack.c.b16 %v259, %v258
    %v271 = vpack.c.b16 %v261, %v260
    %v272 = vpack.c.b16 %v263, %v262
    %v273 = vpack.c.b16 %v265, %v264
    %282 = vmatprep.subr.bf16.mxu0 0
    %283 = vmatpush1.bf16.msra.mxu0 %v266
    %284 = vmatprep.subr.bf16.mxu0 0
    %285 = vmatpush1.bf16.msra.mxu0 %v267
    %286 = vmatprep.subr.bf16.mxu0 0
    %287 = vmatpush1.bf16.msra.mxu0 %v268
    %288 = vmatprep.subr.bf16.mxu0 0
    %289 = vmatpush1.bf16.msra.mxu0 %v269
    %290 = vmatprep.subr.bf16.mxu0 0
    %291 = vmatpush1.bf16.msra.mxu0 %v270
    %292 = vmatprep.subr.bf16.mxu0 0
    %293 = vmatpush1.bf16.msra.mxu0 %v271
    %294 = vmatprep.subr.bf16.mxu0 0
    %295 = vmatpush1.bf16.msra.mxu0 %v272
    %296 = vmatprep.subr.bf16.mxu0 0
    %297 = vmatpush1.bf16.msra.mxu0 %v273
    %298 = vmatprep.subr.bf16.mxu0 0
    %299 = vmatpush1.bf16.msra.mxu0 0
    %300 = vmatprep.subr.bf16.mxu0 0
    %301 = vmatpush1.bf16.msra.mxu0 0
    %302 = vmatprep.subr.bf16.mxu0 0
    %303 = vmatpush1.bf16.msra.mxu0 0
    %304 = vmatprep.subr.bf16.mxu0 0
    %305 = vmatpush1.bf16.msra.mxu0 0
    %306 = vmatprep.subr.bf16.mxu0 0
    %307 = vmatpush1.bf16.msra.mxu0 0
    %308 = vmatprep.subr.bf16.mxu0 0
    %309 = vmatpush1.bf16.msra.mxu0 0
    %310 = vmatprep.subr.bf16.mxu0 0
    %311 = vmatpush1.bf16.msra.mxu0 0
    %312 = vmatprep.subr.bf16.mxu0 0
    %313 = vmatpush1.bf16.msra.mxu0 0
    %314 = vmatprep.mubr.bf16.mxu0 0
    %315 = vmatmul.mubr.bf16.gmra.mrb[0].mxu0 %v218
    %v316 = vpop.f32.mrb[0].mxu0
    %v317 = vadd.f32 %v184, %v316
    %v318 = vpop.f32.mrb[0].mxu0
    %v319 = vpop.f32.mrb[0].mxu0
    %v320 = vadd.f32 %v184, %v319
    %v321 = vpop.f32.mrb[0].mxu0
    %322 = vmatprep.mubr.bf16.mxu0 0
    %323 = vmatmul.mubr.bf16.gmra.mrb[0].mxu0 %v219
    %v324 = vpop.f32.mrb[0].mxu0
    %v325 = vadd.f32 %v184, %v324
    %v326 = vpop.f32.mrb[0].mxu0
    %v327 = vpop.f32.mrb[0].mxu0
    %v328 = vadd.f32 %v184, %v327
    %v329 = vpop.f32.mrb[0].mxu0
    %330 = vmatprep.mubr.bf16.mxu0 0
    %331 = vmatmul.mubr.bf16.gmra.mrb[0].mxu0 %v220
    %v332 = vpop.f32.mrb[0].mxu0
    %v333 = vadd.f32 %v184, %v332
    %v334 = vpop.f32.mrb[0].mxu0
    %v335 = vpop.f32.mrb[0].mxu0
    %v336 = vadd.f32 %v184, %v335
    %v337 = vpop.f32.mrb[0].mxu0
    %338 = vmatprep.mubr.bf16.mxu0 0
    %339 = vmatmul.mubr.bf16.gmra.mrb[0].mxu0 %v221
    %v340 = vpop.f32.mrb[0].mxu0
    %v341 = vadd.f32 %v184, %v340
    %v342 = vpop.f32.mrb[0].mxu0
    %v343 = vpop.f32.mrb[0].mxu0
    %v344 = vadd.f32 %v184, %v343
    %v345 = vpop.f32.mrb[0].mxu0
    %346 = vmatprep.mubr.bf16.mxu0 0
    %347 = vmatmul.mubr.bf16.gmra.mrb[0].mxu0 %v222
    %v348 = vpop.f32.mrb[0].mxu0
    %v349 = vadd.f32 %v184, %v348
    %v350 = vpop.f32.mrb[0].mxu0
    %v351 = vpop.f32.mrb[0].mxu0
    %v352 = vadd.f32 %v184, %v351
    %v353 = vpop.f32.mrb[0].mxu0
    %354 = vmatprep.mubr.bf16.mxu0 0
    %355 = vmatmul.mubr.bf16.gmra.mrb[0].mxu0 %v223
    %v356 = vpop.f32.mrb[0].mxu0
    %v357 = vadd.f32 %v184, %v356
    %v358 = vpop.f32.mrb[0].mxu0
    %v359 = vpop.f32.mrb[0].mxu0
    %v360 = vadd.f32 %v184, %v359
    %v361 = vpop.f32.mrb[0].mxu0
    %362 = vmatprep.mubr.bf16.mxu0 0
    %363 = vmatmul.mubr.bf16.gmra.mrb[0].mxu0 %v224
    %v364 = vpop.f32.mrb[0].mxu0
    %v365 = vadd.f32 %v184, %v364
    %v366 = vpop.f32.mrb[0].mxu0
    %v367 = vpop.f32.mrb[0].mxu0
    %v368 = vadd.f32 %v184, %v367
    %v369 = vpop.f32.mrb[0].mxu0
    %370 = vmatprep.mubr.bf16.mxu0 0
    %371 = vmatmul.mubr.bf16.gmra.mrb[0].mxu0 %v225
    %v372 = vpop.f32.mrb[0].mxu0
    %v373 = vadd.f32 %v184, %v372
    %v374 = vpop.f32.mrb[0].mxu0
    %v375 = vpop.f32.mrb[0].mxu0
    %v376 = vadd.f32 %v184, %v375
    %v377 = vpop.f32.mrb[0].mxu0
    %378 = vdwg.mxu0
    %v379 = vmax.f32 %v317, 0.0
    %v380 = vmax.f32 %v320, 0.0
    %v381 = vmax.f32 %v325, 0.0
    %v382 = vmax.f32 %v328, 0.0
    %v383 = vmax.f32 %v333, 0.0
    %v384 = vmax.f32 %v336, 0.0
    %v385 = vmax.f32 %v341, 0.0
    %v386 = vmax.f32 %v344, 0.0
    %v387 = vmax.f32 %v349, 0.0
    %v388 = vmax.f32 %v352, 0.0
    %v389 = vmax.f32 %v357, 0.0
    %v390 = vmax.f32 %v360, 0.0
    %v391 = vmax.f32 %v365, 0.0
    %v392 = vmax.f32 %v368, 0.0
    %v393 = vmax.f32 %v373, 0.0
    %v394 = vmax.f32 %v376, 0.0
    %v395 = vpack.c.bf16 %v380, %v379
    %v396 = vpack.c.bf16 %v382, %v381
    %v397 = vpack.c.bf16 %v384, %v383
    %v398 = vpack.c.bf16 %v386, %v385
    %v399 = vpack.c.bf16 %v388, %v387
    %v400 = vpack.c.bf16 %v390, %v389
    %v401 = vpack.c.bf16 %v392, %v391
    %v402 = vpack.c.bf16 %v394, %v393
    %v403 = vld [vmem:[#allocation7] sm:$0xf]
    %v404 = vld [vmem:[#allocation7 + $0x4] sm:$0xf]
    %v405 = vld [vmem:[#allocation7 + $0x8] sm:$0xf]
    %v406 = vld [vmem:[#allocation7 + $0xc] sm:$0xf]
    %v407 = vld [vmem:[#allocation7 + $0x10] sm:$0xf]
    %v408 = vld [vmem:[#allocation7 + $0x14] sm:$0xf]
    %v409 = vld [vmem:[#allocation7 + $0x18] sm:$0xf]
    %v410 = vld [vmem:[#allocation7 + $0x1c] sm:$0xf]
    %v411 = vld [vmem:[#allocation7 + $0x20] sm:$0xf]
    %v412 = vld [vmem:[#allocation7 + $0x24] sm:$0xf]
    %v413 = vld [vmem:[#allocation7 + $0x28] sm:$0xf]
    %v414 = vld [vmem:[#allocation7 + $0x2c] sm:$0xf]
    %v415 = vld [vmem:[#allocation7 + $0x30] sm:$0xf]
    %v416 = vld [vmem:[#allocation7 + $0x34] sm:$0xf]
    %v417 = vld [vmem:[#allocation7 + $0x38] sm:$0xf]
    %v418 = vld [vmem:[#allocation7 + $0x3c] sm:$0xf]
    %v435 = vunpack.c.l.b16 %v403
    %v436 = vunpack.c.l.b16 %v404
    %v437 = vunpack.c.l.b16 %v405
    %v438 = vunpack.c.l.b16 %v406
    %v439 = vunpack.c.l.b16 %v407
    %v440 = vunpack.c.l.b16 %v408
    %v441 = vunpack.c.l.b16 %v409
    %v442 = vunpack.c.l.b16 %v410
    %v443 = vunpack.c.l.b16 %v411
    %v444 = vunpack.c.l.b16 %v412
    %v445 = vunpack.c.l.b16 %v413
    %v446 = vunpack.c.l.b16 %v414
    %v447 = vunpack.c.l.b16 %v415
    %v448 = vunpack.c.l.b16 %v416
    %v449 = vunpack.c.l.b16 %v417
    %v450 = vunpack.c.l.b16 %v418
    %v451 = vpack.c.b16 %v436, %v435
    %v452 = vpack.c.b16 %v438, %v437
    %v453 = vpack.c.b16 %v440, %v439
    %v454 = vpack.c.b16 %v442, %v441
    %v455 = vpack.c.b16 %v444, %v443
    %v456 = vpack.c.b16 %v446, %v445
    %v457 = vpack.c.b16 %v448, %v447
    %v458 = vpack.c.b16 %v450, %v449
    %467 = vmatprep.subr.bf16.mxu0 0
    %468 = vmatpush1.bf16.msra.mxu0 %v451
    %469 = vmatprep.subr.bf16.mxu0 0
    %470 = vmatpush1.bf16.msra.mxu0 %v452
    %471 = vmatprep.subr.bf16.mxu0 0
    %472 = vmatpush1.bf16.msra.mxu0 %v453
    %473 = vmatprep.subr.bf16.mxu0 0
    %474 = vmatpush1.bf16.msra.mxu0 %v454
    %475 = vmatprep.subr.bf16.mxu0 0
    %476 = vmatpush1.bf16.msra.mxu0 %v455
    %477 = vmatprep.subr.bf16.mxu0 0
    %478 = vmatpush1.bf16.msra.mxu0 %v456
    %479 = vmatprep.subr.bf16.mxu0 0
    %480 = vmatpush1.bf16.msra.mxu0 %v457
    %481 = vmatprep.subr.bf16.mxu0 0
    %482 = vmatpush1.bf16.msra.mxu0 %v458
    %483 = vmatprep.subr.bf16.mxu0 0
    %484 = vmatpush1.bf16.msra.mxu0 0
    %485 = vmatprep.subr.bf16.mxu0 0
    %486 = vmatpush1.bf16.msra.mxu0 0
    %487 = vmatprep.subr.bf16.mxu0 0
    %488 = vmatpush1.bf16.msra.mxu0 0
    %489 = vmatprep.subr.bf16.mxu0 0
    %490 = vmatpush1.bf16.msra.mxu0 0
    %491 = vmatprep.subr.bf16.mxu0 0
    %492 = vmatpush1.bf16.msra.mxu0 0
    %493 = vmatprep.subr.bf16.mxu0 0
    %494 = vmatpush1.bf16.msra.mxu0 0
    %495 = vmatprep.subr.bf16.mxu0 0
    %496 = vmatpush1.bf16.msra.mxu0 0
    %497 = vmatprep.subr.bf16.mxu0 0
    %498 = vmatpush1.bf16.msra.mxu0 0
    %499 = vmatprep.mubr.bf16.mxu0 0
    %500 = vmatmul.mubr.bf16.gmra.mrb[0].mxu0 %v395
    %v501 = vpop.f32.mrb[0].mxu0
    %v502 = vadd.f32 0.0, %v501
    %v503 = vpop.f32.mrb[0].mxu0
    %v504 = vpop.f32.mrb[0].mxu0
    %v505 = vadd.f32 0.0, %v504
    %v506 = vpop.f32.mrb[0].mxu0
    %507 = vmatprep.mubr.bf16.mxu0 0
    %508 = vmatmul.mubr.bf16.gmra.mrb[0].mxu0 %v396
    %v509 = vpop.f32.mrb[0].mxu0
    %v510 = vadd.f32 0.0, %v509
    %v511 = vpop.f32.mrb[0].mxu0
    %v512 = vpop.f32.mrb[0].mxu0
    %v513 = vadd.f32 0.0, %v512
    %v514 = vpop.f32.mrb[0].mxu0
    %515 = vmatprep.mubr.bf16.mxu0 0
    %516 = vmatmul.mubr.bf16.gmra.mrb[0].mxu0 %v397
    %v517 = vpop.f32.mrb[0].mxu0
    %v518 = vadd.f32 0.0, %v517
    %v519 = vpop.f32.mrb[0].mxu0
    %v520 = vpop.f32.mrb[0].mxu0
    %v521 = vadd.f32 0.0, %v520
    %v522 = vpop.f32.mrb[0].mxu0
    %523 = vmatprep.mubr.bf16.mxu0 0
    %524 = vmatmul.mubr.bf16.gmra.mrb[0].mxu0 %v398
    %v525 = vpop.f32.mrb[0].mxu0
    %v526 = vadd.f32 0.0, %v525
    %v527 = vpop.f32.mrb[0].mxu0
    %v528 = vpop.f32.mrb[0].mxu0
    %v529 = vadd.f32 0.0, %v528
    %v530 = vpop.f32.mrb[0].mxu0
    %531 = vmatprep.mubr.bf16.mxu0 0
    %532 = vmatmul.mubr.bf16.gmra.mrb[0].mxu0 %v399
    %v533 = vpop.f32.mrb[0].mxu0
    %v534 = vadd.f32 0.0, %v533
    %v535 = vpop.f32.mrb[0].mxu0
    %v536 = vpop.f32.mrb[0].mxu0
    %v537 = vadd.f32 0.0, %v536
    %v538 = vpop.f32.mrb[0].mxu0
    %539 = vmatprep.mubr.bf16.mxu0 0
    %540 = vmatmul.mubr.bf16.gmra.mrb[0].mxu0 %v400
    %v541 = vpop.f32.mrb[0].mxu0
    %v542 = vadd.f32 0.0, %v541
    %v543 = vpop.f32.mrb[0].mxu0
    %v544 = vpop.f32.mrb[0].mxu0
    %v545 = vadd.f32 0.0, %v544
    %v546 = vpop.f32.mrb[0].mxu0
    %547 = vmatprep.mubr.bf16.mxu0 0
    %548 = vmatmul.mubr.bf16.gmra.mrb[0].mxu0 %v401
    %v549 = vpop.f32.mrb[0].mxu0
    %v550 = vadd.f32 0.0, %v549
    %v551 = vpop.f32.mrb[0].mxu0
    %v552 = vpop.f32.mrb[0].mxu0
    %v553 = vadd.f32 0.0, %v552
    %v554 = vpop.f32.mrb[0].mxu0
    %555 = vmatprep.mubr.bf16.mxu0 0
    %556 = vmatmul.mubr.bf16.gmra.mrb[0].mxu0 %v402
    %v557 = vpop.f32.mrb[0].mxu0
    %v558 = vadd.f32 0.0, %v557
    %v559 = vpop.f32.mrb[0].mxu0
    %v560 = vpop.f32.mrb[0].mxu0
    %v561 = vadd.f32 0.0, %v560
    %v562 = vpop.f32.mrb[0].mxu0
    %563 = vdwg.mxu0
    %v564 = vpack.c.bf16 %v505, %v502
    %v565 = vpack.c.bf16 %v513, %v510
    %v566 = vpack.c.bf16 %v521, %v518
    %v567 = vpack.c.bf16 %v529, %v526
    %v568 = vpack.c.bf16 %v537, %v534
    %v569 = vpack.c.bf16 %v545, %v542
    %v570 = vpack.c.bf16 %v553, %v550
    %v571 = vpack.c.bf16 %v561, %v558
    %v572 = vld [vmem:[%s6] sm:$0x1]
    %v574 = vlaneseq
    %v575 = vshrl.u32 %v574, 7
    %v576 = vsub.s32 0, %v575
    %v577 = vrot.slane %v572, %v576
    %579 = vmatprep.subr.bf16.mxu0 0
    %580 = vmatpush1.bf16.msra.mxu0 %v564
    %581 = vmatprep.subr.bf16.mxu0 0
    %582 = vmatpush1.bf16.msra.mxu0 %v565
    %583 = vmatprep.subr.bf16.mxu0 0
    %584 = vmatpush1.bf16.msra.mxu0 %v566
    %585 = vmatprep.subr.bf16.mxu0 0
    %586 = vmatpush1.bf16.msra.mxu0 %v567
    %587 = vmatprep.subr.bf16.mxu0 0
    %588 = vmatpush1.bf16.msra.mxu0 %v568
    %589 = vmatprep.subr.bf16.mxu0 0
    %590 = vmatpush1.bf16.msra.mxu0 %v569
    %591 = vmatprep.subr.bf16.mxu0 0
    %592 = vmatpush1.bf16.msra.mxu0 %v570
    %593 = vmatprep.subr.bf16.mxu0 0
    %594 = vmatpush1.bf16.msra.mxu0 %v571
    %595 = vmatprep.subr.bf16.mxu0 0
    %596 = vmatpush1.bf16.msra.mxu0 0
    %597 = vmatprep.subr.bf16.mxu0 0
    %598 = vmatpush1.bf16.msra.mxu0 0
    %599 = vmatprep.subr.bf16.mxu0 0
    %600 = vmatpush1.bf16.msra.mxu0 0
    %601 = vmatprep.subr.bf16.mxu0 0
    %602 = vmatpush1.bf16.msra.mxu0 0
    %603 = vmatprep.subr.bf16.mxu0 0
    %604 = vmatpush1.bf16.msra.mxu0 0
    %605 = vmatprep.subr.bf16.mxu0 0
    %606 = vmatpush1.bf16.msra.mxu0 0
    %607 = vmatprep.subr.bf16.mxu0 0
    %608 = vmatpush1.bf16.msra.mxu0 0
    %609 = vmatprep.subr.bf16.mxu0 0
    %610 = vmatpush1.bf16.msra.mxu0 0
    %611 = vmatprep.mubr.bf16.mxu0 0
    %612 = vmatmul.mubr.bf16.gmra.mrb[0].mxu0 %v218
    %v613 = vpop.f32.mrb[0].mxu0
    %v614 = vadd.f32 %v577, %v613
    %v615 = vpop.f32.mrb[0].mxu0
    %v616 = vpop.f32.mrb[0].mxu0
    %v617 = vadd.f32 %v577, %v616
    %v618 = vpop.f32.mrb[0].mxu0
    %619 = vmatprep.mubr.bf16.mxu0 0
    %620 = vmatmul.mubr.bf16.gmra.mrb[0].mxu0 %v219
    %v621 = vpop.f32.mrb[0].mxu0
    %v622 = vadd.f32 %v577, %v621
    %v623 = vpop.f32.mrb[0].mxu0
    %v624 = vpop.f32.mrb[0].mxu0
    %v625 = vadd.f32 %v577, %v624
    %v626 = vpop.f32.mrb[0].mxu0
    %627 = vmatprep.mubr.bf16.mxu0 0
    %628 = vmatmul.mubr.bf16.gmra.mrb[0].mxu0 %v220
    %v629 = vpop.f32.mrb[0].mxu0
    %v630 = vadd.f32 %v577, %v629
    %v631 = vpop.f32.mrb[0].mxu0
    %v632 = vpop.f32.mrb[0].mxu0
    %v633 = vadd.f32 %v577, %v632
    %v634 = vpop.f32.mrb[0].mxu0
    %635 = vmatprep.mubr.bf16.mxu0 0
    %636 = vmatmul.mubr.bf16.gmra.mrb[0].mxu0 %v221
    %v637 = vpop.f32.mrb[0].mxu0
    %v638 = vadd.f32 %v577, %v637
    %v639 = vpop.f32.mrb[0].mxu0
    %v640 = vpop.f32.mrb[0].mxu0
    %v641 = vadd.f32 %v577, %v640
    %v642 = vpop.f32.mrb[0].mxu0
    %643 = vmatprep.mubr.bf16.mxu0 0
    %644 = vmatmul.mubr.bf16.gmra.mrb[0].mxu0 %v222
    %v645 = vpop.f32.mrb[0].mxu0
    %v646 = vadd.f32 %v577, %v645
    %v647 = vpop.f32.mrb[0].mxu0
    %v648 = vpop.f32.mrb[0].mxu0
    %v649 = vadd.f32 %v577, %v648
    %v650 = vpop.f32.mrb[0].mxu0
    %651 = vmatprep.mubr.bf16.mxu0 0
    %652 = vmatmul.mubr.bf16.gmra.mrb[0].mxu0 %v223
    %v653 = vpop.f32.mrb[0].mxu0
    %v654 = vadd.f32 %v577, %v653
    %v655 = vpop.f32.mrb[0].mxu0
    %v656 = vpop.f32.mrb[0].mxu0
    %v657 = vadd.f32 %v577, %v656
    %v658 = vpop.f32.mrb[0].mxu0
    %659 = vmatprep.mubr.bf16.mxu0 0
    %660 = vmatmul.mubr.bf16.gmra.mrb[0].mxu0 %v224
    %v661 = vpop.f32.mrb[0].mxu0
    %v662 = vadd.f32 %v577, %v661
    %v663 = vpop.f32.mrb[0].mxu0
    %v664 = vpop.f32.mrb[0].mxu0
    %v665 = vadd.f32 %v577, %v664
    %v666 = vpop.f32.mrb[0].mxu0
    %667 = vmatprep.mubr.bf16.mxu0 0
    %668 = vmatmul.mubr.bf16.gmra.mrb[0].mxu0 %v225
    %v669 = vpop.f32.mrb[0].mxu0
    %v670 = vadd.f32 %v577, %v669
    %v671 = vpop.f32.mrb[0].mxu0
    %v672 = vpop.f32.mrb[0].mxu0
    %v673 = vadd.f32 %v577, %v672
    %v674 = vpop.f32.mrb[0].mxu0
    %675 = vdwg.mxu0
    %v676 = vmax.f32 %v614, 0.0
    %v677 = vmax.f32 %v617, 0.0
    %v678 = vmax.f32 %v622, 0.0
    %v679 = vmax.f32 %v625, 0.0
    %v680 = vmax.f32 %v630, 0.0
    %v681 = vmax.f32 %v633, 0.0
    %v682 = vmax.f32 %v638, 0.0
    %v683 = vmax.f32 %v641, 0.0
    %v684 = vmax.f32 %v646, 0.0
    %v685 = vmax.f32 %v649, 0.0
    %v686 = vmax.f32 %v654, 0.0
    %v687 = vmax.f32 %v657, 0.0
    %v688 = vmax.f32 %v662, 0.0
    %v689 = vmax.f32 %v665, 0.0
    %v690 = vmax.f32 %v670, 0.0
    %v691 = vmax.f32 %v673, 0.0
    %v692 = vpack.c.bf16 %v677, %v676
    %v693 = vpack.c.bf16 %v679, %v678
    %v694 = vpack.c.bf16 %v681, %v680
    %v695 = vpack.c.bf16 %v683, %v682
    %v696 = vpack.c.bf16 %v685, %v684
    %v697 = vpack.c.bf16 %v687, %v686
    %v698 = vpack.c.bf16 %v689, %v688
    %v699 = vpack.c.bf16 %v691, %v690
    %v700 = vld [vmem:[#allocation8] sm:$0xf]
    %v701 = vld [vmem:[#allocation8 + $0x4] sm:$0xf]
    %v702 = vld [vmem:[#allocation8 + $0x8] sm:$0xf]
    %v703 = vld [vmem:[#allocation8 + $0xc] sm:$0xf]
    %v704 = vld [vmem:[#allocation8 + $0x10] sm:$0xf]
    %v705 = vld [vmem:[#allocation8 + $0x14] sm:$0xf]
    %v706 = vld [vmem:[#allocation8 + $0x18] sm:$0xf]
    %v707 = vld [vmem:[#allocation8 + $0x1c] sm:$0xf]
    %v708 = vld [vmem:[#allocation8 + $0x20] sm:$0xf]
    %v709 = vld [vmem:[#allocation8 + $0x24] sm:$0xf]
    %v710 = vld [vmem:[#allocation8 + $0x28] sm:$0xf]
    %v711 = vld [vmem:[#allocation8 + $0x2c] sm:$0xf]
    %v712 = vld [vmem:[#allocation8 + $0x30] sm:$0xf]
    %v713 = vld [vmem:[#allocation8 + $0x34] sm:$0xf]
    %v714 = vld [vmem:[#allocation8 + $0x38] sm:$0xf]
    %v715 = vld [vmem:[#allocation8 + $0x3c] sm:$0xf]
    %v732 = vunpack.c.l.b16 %v700
    %v733 = vunpack.c.l.b16 %v701
    %v734 = vunpack.c.l.b16 %v702
    %v735 = vunpack.c.l.b16 %v703
    %v736 = vunpack.c.l.b16 %v704
    %v737 = vunpack.c.l.b16 %v705
    %v738 = vunpack.c.l.b16 %v706
    %v739 = vunpack.c.l.b16 %v707
    %v740 = vunpack.c.l.b16 %v708
    %v741 = vunpack.c.l.b16 %v709
    %v742 = vunpack.c.l.b16 %v710
    %v743 = vunpack.c.l.b16 %v711
    %v744 = vunpack.c.l.b16 %v712
    %v745 = vunpack.c.l.b16 %v713
    %v746 = vunpack.c.l.b16 %v714
    %v747 = vunpack.c.l.b16 %v715
    %v748 = vpack.c.b16 %v733, %v732
    %v749 = vpack.c.b16 %v735, %v734
    %v750 = vpack.c.b16 %v737, %v736
    %v751 = vpack.c.b16 %v739, %v738
    %v752 = vpack.c.b16 %v741, %v740
    %v753 = vpack.c.b16 %v743, %v742
    %v754 = vpack.c.b16 %v745, %v744
    %v755 = vpack.c.b16 %v747, %v746
    %764 = vmatprep.subr.bf16.mxu0 0
    %765 = vmatpush1.bf16.msra.mxu0 %v748
    %766 = vmatprep.subr.bf16.mxu0 0
    %767 = vmatpush1.bf16.msra.mxu0 %v749
    %768 = vmatprep.subr.bf16.mxu0 0
    %769 = vmatpush1.bf16.msra.mxu0 %v750
    %770 = vmatprep.subr.bf16.mxu0 0
    %771 = vmatpush1.bf16.msra.mxu0 %v751
    %772 = vmatprep.subr.bf16.mxu0 0
    %773 = vmatpush1.bf16.msra.mxu0 %v752
    %774 = vmatprep.subr.bf16.mxu0 0
    %775 = vmatpush1.bf16.msra.mxu0 %v753
    %776 = vmatprep.subr.bf16.mxu0 0
    %777 = vmatpush1.bf16.msra.mxu0 %v754
    %778 = vmatprep.subr.bf16.mxu0 0
    %779 = vmatpush1.bf16.msra.mxu0 %v755
    %780 = vmatprep.subr.bf16.mxu0 0
    %781 = vmatpush1.bf16.msra.mxu0 0
    %782 = vmatprep.subr.bf16.mxu0 0
    %783 = vmatpush1.bf16.msra.mxu0 0
    %784 = vmatprep.subr.bf16.mxu0 0
    %785 = vmatpush1.bf16.msra.mxu0 0
    %786 = vmatprep.subr.bf16.mxu0 0
    %787 = vmatpush1.bf16.msra.mxu0 0
    %788 = vmatprep.subr.bf16.mxu0 0
    %789 = vmatpush1.bf16.msra.mxu0 0
    %790 = vmatprep.subr.bf16.mxu0 0
    %791 = vmatpush1.bf16.msra.mxu0 0
    %792 = vmatprep.subr.bf16.mxu0 0
    %793 = vmatpush1.bf16.msra.mxu0 0
    %794 = vmatprep.subr.bf16.mxu0 0
    %795 = vmatpush1.bf16.msra.mxu0 0
    %796 = vmatprep.mubr.bf16.mxu0 0
    %797 = vmatmul.mubr.bf16.gmra.mrb[0].mxu0 %v692
    %v798 = vpop.f32.mrb[0].mxu0
    %v799 = vadd.f32 0.0, %v798
    %v800 = vpop.f32.mrb[0].mxu0
    %v801 = vpop.f32.mrb[0].mxu0
    %v802 = vadd.f32 0.0, %v801
    %v803 = vpop.f32.mrb[0].mxu0
    %804 = vmatprep.mubr.bf16.mxu0 0
    %805 = vmatmul.mubr.bf16.gmra.mrb[0].mxu0 %v693
    %v806 = vpop.f32.mrb[0].mxu0
    %v807 = vadd.f32 0.0, %v806
    %v808 = vpop.f32.mrb[0].mxu0
    %v809 = vpop.f32.mrb[0].mxu0
    %v810 = vadd.f32 0.0, %v809
    %v811 = vpop.f32.mrb[0].mxu0
    %812 = vmatprep.mubr.bf16.mxu0 0
    %813 = vmatmul.mubr.bf16.gmra.mrb[0].mxu0 %v694
    %v814 = vpop.f32.mrb[0].mxu0
    %v815 = vadd.f32 0.0, %v814
    %v816 = vpop.f32.mrb[0].mxu0
    %v817 = vpop.f32.mrb[0].mxu0
    %v818 = vadd.f32 0.0, %v817
    %v819 = vpop.f32.mrb[0].mxu0
    %820 = vmatprep.mubr.bf16.mxu0 0
    %821 = vmatmul.mubr.bf16.gmra.mrb[0].mxu0 %v695
    %v822 = vpop.f32.mrb[0].mxu0
    %v823 = vadd.f32 0.0, %v822
    %v824 = vpop.f32.mrb[0].mxu0
    %v825 = vpop.f32.mrb[0].mxu0
    %v826 = vadd.f32 0.0, %v825
    %v827 = vpop.f32.mrb[0].mxu0
    %828 = vmatprep.mubr.bf16.mxu0 0
    %829 = vmatmul.mubr.bf16.gmra.mrb[0].mxu0 %v696
    %v830 = vpop.f32.mrb[0].mxu0
    %v831 = vadd.f32 0.0, %v830
    %v832 = vpop.f32.mrb[0].mxu0
    %v833 = vpop.f32.mrb[0].mxu0
    %v834 = vadd.f32 0.0, %v833
    %v835 = vpop.f32.mrb[0].mxu0
    %836 = vmatprep.mubr.bf16.mxu0 0
    %837 = vmatmul.mubr.bf16.gmra.mrb[0].mxu0 %v697
    %v838 = vpop.f32.mrb[0].mxu0
    %v839 = vadd.f32 0.0, %v838
    %v840 = vpop.f32.mrb[0].mxu0
    %v841 = vpop.f32.mrb[0].mxu0
    %v842 = vadd.f32 0.0, %v841
    %v843 = vpop.f32.mrb[0].mxu0
    %844 = vmatprep.mubr.bf16.mxu0 0
    %845 = vmatmul.mubr.bf16.gmra.mrb[0].mxu0 %v698
    %v846 = vpop.f32.mrb[0].mxu0
    %v847 = vadd.f32 0.0, %v846
    %v848 = vpop.f32.mrb[0].mxu0
    %v849 = vpop.f32.mrb[0].mxu0
    %v850 = vadd.f32 0.0, %v849
    %v851 = vpop.f32.mrb[0].mxu0
    %852 = vmatprep.mubr.bf16.mxu0 0
    %853 = vmatmul.mubr.bf16.gmra.mrb[0].mxu0 %v699
    %v854 = vpop.f32.mrb[0].mxu0
    %v855 = vadd.f32 0.0, %v854
    %v856 = vpop.f32.mrb[0].mxu0
    %v857 = vpop.f32.mrb[0].mxu0
    %v858 = vadd.f32 0.0, %v857
    %v859 = vpop.f32.mrb[0].mxu0
    %860 = vdwg.mxu0
    %v861 = vpack.c.bf16 %v802, %v799
    %v862 = vpack.c.bf16 %v810, %v807
    %v863 = vpack.c.bf16 %v818, %v815
    %v864 = vpack.c.bf16 %v826, %v823
    %v865 = vpack.c.bf16 %v834, %v831
    %v866 = vpack.c.bf16 %v842, %v839
    %v867 = vpack.c.bf16 %v850, %v847
    %v868 = vpack.c.bf16 %v858, %v855
    %v869 = vld [vmem:[%s8] sm:$0x1]
    %v871 = vlaneseq
    %v872 = vshrl.u32 %v871, 7
    %v873 = vsub.s32 0, %v872
    %v874 = vrot.slane %v869, %v873
    %876 = vmatprep.subr.bf16.mxu0 0
    %877 = vmatpush1.bf16.msra.mxu0 %v861
    %878 = vmatprep.subr.bf16.mxu0 0
    %879 = vmatpush1.bf16.msra.mxu0 %v862
    %880 = vmatprep.subr.bf16.mxu0 0
    %881 = vmatpush1.bf16.msra.mxu0 %v863
    %882 = vmatprep.subr.bf16.mxu0 0
    %883 = vmatpush1.bf16.msra.mxu0 %v864
    %884 = vmatprep.subr.bf16.mxu0 0
    %885 = vmatpush1.bf16.msra.mxu0 %v865
    %886 = vmatprep.subr.bf16.mxu0 0
    %887 = vmatpush1.bf16.msra.mxu0 %v866
    %888 = vmatprep.subr.bf16.mxu0 0
    %889 = vmatpush1.bf16.msra.mxu0 %v867
    %890 = vmatprep.subr.bf16.mxu0 0
    %891 = vmatpush1.bf16.msra.mxu0 %v868
    %892 = vmatprep.subr.bf16.mxu0 0
    %893 = vmatpush1.bf16.msra.mxu0 0
    %894 = vmatprep.subr.bf16.mxu0 0
    %895 = vmatpush1.bf16.msra.mxu0 0
    %896 = vmatprep.subr.bf16.mxu0 0
    %897 = vmatpush1.bf16.msra.mxu0 0
    %898 = vmatprep.subr.bf16.mxu0 0
    %899 = vmatpush1.bf16.msra.mxu0 0
    %900 = vmatprep.subr.bf16.mxu0 0
    %901 = vmatpush1.bf16.msra.mxu0 0
    %902 = vmatprep.subr.bf16.mxu0 0
    %903 = vmatpush1.bf16.msra.mxu0 0
    %904 = vmatprep.subr.bf16.mxu0 0
    %905 = vmatpush1.bf16.msra.mxu0 0
    %906 = vmatprep.subr.bf16.mxu0 0
    %907 = vmatpush1.bf16.msra.mxu0 0
    %908 = vmatprep.mubr.bf16.mxu0 0
    %909 = vmatmul.mubr.bf16.gmra.mrb[0].mxu0 %v218
    %v910 = vpop.f32.mrb[0].mxu0
    %v911 = vadd.f32 %v874, %v910
    %v912 = vpop.f32.mrb[0].mxu0
    %v913 = vpop.f32.mrb[0].mxu0
    %v914 = vadd.f32 %v874, %v913
    %v915 = vpop.f32.mrb[0].mxu0
    %916 = vmatprep.mubr.bf16.mxu0 0
    %917 = vmatmul.mubr.bf16.gmra.mrb[0].mxu0 %v219
    %v918 = vpop.f32.mrb[0].mxu0
    %v919 = vadd.f32 %v874, %v918
    %v920 = vpop.f32.mrb[0].mxu0
    %v921 = vpop.f32.mrb[0].mxu0
    %v922 = vadd.f32 %v874, %v921
    %v923 = vpop.f32.mrb[0].mxu0
    %924 = vmatprep.mubr.bf16.mxu0 0
    %925 = vmatmul.mubr.bf16.gmra.mrb[0].mxu0 %v220
    %v926 = vpop.f32.mrb[0].mxu0
    %v927 = vadd.f32 %v874, %v926
    %v928 = vpop.f32.mrb[0].mxu0
    %v929 = vpop.f32.mrb[0].mxu0
    %v930 = vadd.f32 %v874, %v929
    %v931 = vpop.f32.mrb[0].mxu0
    %932 = vmatprep.mubr.bf16.mxu0 0
    %933 = vmatmul.mubr.bf16.gmra.mrb[0].mxu0 %v221
    %v934 = vpop.f32.mrb[0].mxu0
    %v935 = vadd.f32 %v874, %v934
    %v936 = vpop.f32.mrb[0].mxu0
    %v937 = vpop.f32.mrb[0].mxu0
    %v938 = vadd.f32 %v874, %v937
    %v939 = vpop.f32.mrb[0].mxu0
    %940 = vmatprep.mubr.bf16.mxu0 0
    %941 = vmatmul.mubr.bf16.gmra.mrb[0].mxu0 %v222
    %v942 = vpop.f32.mrb[0].mxu0
    %v943 = vadd.f32 %v874, %v942
    %v944 = vpop.f32.mrb[0].mxu0
    %v945 = vpop.f32.mrb[0].mxu0
    %v946 = vadd.f32 %v874, %v945
    %v947 = vpop.f32.mrb[0].mxu0
    %948 = vmatprep.mubr.bf16.mxu0 0
    %949 = vmatmul.mubr.bf16.gmra.mrb[0].mxu0 %v223
    %v950 = vpop.f32.mrb[0].mxu0
    %v951 = vadd.f32 %v874, %v950
    %v952 = vpop.f32.mrb[0].mxu0
    %v953 = vpop.f32.mrb[0].mxu0
    %v954 = vadd.f32 %v874, %v953
    %v955 = vpop.f32.mrb[0].mxu0
    %956 = vmatprep.mubr.bf16.mxu0 0
    %957 = vmatmul.mubr.bf16.gmra.mrb[0].mxu0 %v224
    %v958 = vpop.f32.mrb[0].mxu0
    %v959 = vadd.f32 %v874, %v958
    %v960 = vpop.f32.mrb[0].mxu0
    %v961 = vpop.f32.mrb[0].mxu0
    %v962 = vadd.f32 %v874, %v961
    %v963 = vpop.f32.mrb[0].mxu0
    %964 = vmatprep.mubr.bf16.mxu0 0
    %965 = vmatmul.mubr.bf16.gmra.mrb[0].mxu0 %v225
    %v966 = vpop.f32.mrb[0].mxu0
    %v967 = vadd.f32 %v874, %v966
    %v968 = vpop.f32.mrb[0].mxu0
    %v969 = vpop.f32.mrb[0].mxu0
    %v970 = vadd.f32 %v874, %v969
    %v971 = vpop.f32.mrb[0].mxu0
    %972 = vdwg.mxu0
    %v973 = vmax.f32 %v911, 0.0
    %v974 = vmax.f32 %v914, 0.0
    %v975 = vmax.f32 %v919, 0.0
    %v976 = vmax.f32 %v922, 0.0
    %v977 = vmax.f32 %v927, 0.0
    %v978 = vmax.f32 %v930, 0.0
    %v979 = vmax.f32 %v935, 0.0
    %v980 = vmax.f32 %v938, 0.0
    %v981 = vmax.f32 %v943, 0.0
    %v982 = vmax.f32 %v946, 0.0
    %v983 = vmax.f32 %v951, 0.0
    %v984 = vmax.f32 %v954, 0.0
    %v985 = vmax.f32 %v959, 0.0
    %v986 = vmax.f32 %v962, 0.0
    %v987 = vmax.f32 %v967, 0.0
    %v988 = vmax.f32 %v970, 0.0
    %v989 = vpack.c.bf16 %v974, %v973
    %v990 = vpack.c.bf16 %v976, %v975
    %v991 = vpack.c.bf16 %v978, %v977
    %v992 = vpack.c.bf16 %v980, %v979
    %v993 = vpack.c.bf16 %v982, %v981
    %v994 = vpack.c.bf16 %v984, %v983
    %v995 = vpack.c.bf16 %v986, %v985
    %v996 = vpack.c.bf16 %v988, %v987
    %v997 = vld [vmem:[#allocation10] sm:$0xf]
    %v998 = vld [vmem:[#allocation10 + $0x4] sm:$0xf]
    %v999 = vld [vmem:[#allocation10 + $0x8] sm:$0xf]
    %v1000 = vld [vmem:[#allocation10 + $0xc] sm:$0xf]
    %v1001 = vld [vmem:[#allocation10 + $0x10] sm:$0xf]
    %v1002 = vld [vmem:[#allocation10 + $0x14] sm:$0xf]
    %v1003 = vld [vmem:[#allocation10 + $0x18] sm:$0xf]
    %v1004 = vld [vmem:[#allocation10 + $0x1c] sm:$0xf]
    %v1005 = vld [vmem:[#allocation10 + $0x20] sm:$0xf]
    %v1006 = vld [vmem:[#allocation10 + $0x24] sm:$0xf]
    %v1007 = vld [vmem:[#allocation10 + $0x28] sm:$0xf]
    %v1008 = vld [vmem:[#allocation10 + $0x2c] sm:$0xf]
    %v1009 = vld [vmem:[#allocation10 + $0x30] sm:$0xf]
    %v1010 = vld [vmem:[#allocation10 + $0x34] sm:$0xf]
    %v1011 = vld [vmem:[#allocation10 + $0x38] sm:$0xf]
    %v1012 = vld [vmem:[#allocation10 + $0x3c] sm:$0xf]
    %v1029 = vunpack.c.l.b16 %v997
    %v1030 = vunpack.c.l.b16 %v998
    %v1031 = vunpack.c.l.b16 %v999
    %v1032 = vunpack.c.l.b16 %v1000
    %v1033 = vunpack.c.l.b16 %v1001
    %v1034 = vunpack.c.l.b16 %v1002
    %v1035 = vunpack.c.l.b16 %v1003
    %v1036 = vunpack.c.l.b16 %v1004
    %v1037 = vunpack.c.l.b16 %v1005
    %v1038 = vunpack.c.l.b16 %v1006
    %v1039 = vunpack.c.l.b16 %v1007
    %v1040 = vunpack.c.l.b16 %v1008
    %v1041 = vunpack.c.l.b16 %v1009
    %v1042 = vunpack.c.l.b16 %v1010
    %v1043 = vunpack.c.l.b16 %v1011
    %v1044 = vunpack.c.l.b16 %v1012
    %v1045 = vpack.c.b16 %v1030, %v1029
    %v1046 = vpack.c.b16 %v1032, %v1031
    %v1047 = vpack.c.b16 %v1034, %v1033
    %v1048 = vpack.c.b16 %v1036, %v1035
    %v1049 = vpack.c.b16 %v1038, %v1037
    %v1050 = vpack.c.b16 %v1040, %v1039
    %v1051 = vpack.c.b16 %v1042, %v1041
    %v1052 = vpack.c.b16 %v1044, %v1043
    %1061 = vmatprep.subr.bf16.mxu0 0
    %1062 = vmatpush1.bf16.msra.mxu0 %v1045
    %1063 = vmatprep.subr.bf16.mxu0 0
    %1064 = vmatpush1.bf16.msra.mxu0 %v1046
    %1065 = vmatprep.subr.bf16.mxu0 0
    %1066 = vmatpush1.bf16.msra.mxu0 %v1047
    %1067 = vmatprep.subr.bf16.mxu0 0
    %1068 = vmatpush1.bf16.msra.mxu0 %v1048
    %1069 = vmatprep.subr.bf16.mxu0 0
    %1070 = vmatpush1.bf16.msra.mxu0 %v1049
    %1071 = vmatprep.subr.bf16.mxu0 0
    %1072 = vmatpush1.bf16.msra.mxu0 %v1050
    %1073 = vmatprep.subr.bf16.mxu0 0
    %1074 = vmatpush1.bf16.msra.mxu0 %v1051
    %1075 = vmatprep.subr.bf16.mxu0 0
    %1076 = vmatpush1.bf16.msra.mxu0 %v1052
    %1077 = vmatprep.subr.bf16.mxu0 0
    %1078 = vmatpush1.bf16.msra.mxu0 0
    %1079 = vmatprep.subr.bf16.mxu0 0
    %1080 = vmatpush1.bf16.msra.mxu0 0
    %1081 = vmatprep.subr.bf16.mxu0 0
    %1082 = vmatpush1.bf16.msra.mxu0 0
    %1083 = vmatprep.subr.bf16.mxu0 0
    %1084 = vmatpush1.bf16.msra.mxu0 0
    %1085 = vmatprep.subr.bf16.mxu0 0
    %1086 = vmatpush1.bf16.msra.mxu0 0
    %1087 = vmatprep.subr.bf16.mxu0 0
    %1088 = vmatpush1.bf16.msra.mxu0 0
    %1089 = vmatprep.subr.bf16.mxu0 0
    %1090 = vmatpush1.bf16.msra.mxu0 0
    %1091 = vmatprep.subr.bf16.mxu0 0
    %1092 = vmatpush1.bf16.msra.mxu0 0
    %1093 = vmatprep.mubr.bf16.mxu0 0
    %1094 = vmatmul.mubr.bf16.gmra.mrb[0].mxu0 %v989
    %v1095 = vpop.f32.mrb[0].mxu0
    %v1096 = vadd.f32 0.0, %v1095
    %v1097 = vpop.f32.mrb[0].mxu0
    %v1098 = vpop.f32.mrb[0].mxu0
    %v1099 = vadd.f32 0.0, %v1098
    %v1100 = vpop.f32.mrb[0].mxu0
    %1101 = vmatprep.mubr.bf16.mxu0 0
    %1102 = vmatmul.mubr.bf16.gmra.mrb[0].mxu0 %v990
    %v1103 = vpop.f32.mrb[0].mxu0
    %v1104 = vadd.f32 0.0, %v1103
    %v1105 = vpop.f32.mrb[0].mxu0
    %v1106 = vpop.f32.mrb[0].mxu0
    %v1107 = vadd.f32 0.0, %v1106
    %v1108 = vpop.f32.mrb[0].mxu0
    %1109 = vmatprep.mubr.bf16.mxu0 0
    %1110 = vmatmul.mubr.bf16.gmra.mrb[0].mxu0 %v991
    %v1111 = vpop.f32.mrb[0].mxu0
    %v1112 = vadd.f32 0.0, %v1111
    %v1113 = vpop.f32.mrb[0].mxu0
    %v1114 = vpop.f32.mrb[0].mxu0
    %v1115 = vadd.f32 0.0, %v1114
    %v1116 = vpop.f32.mrb[0].mxu0
    %1117 = vmatprep.mubr.bf16.mxu0 0
    %1118 = vmatmul.mubr.bf16.gmra.mrb[0].mxu0 %v992
    %v1119 = vpop.f32.mrb[0].mxu0
    %v1120 = vadd.f32 0.0, %v1119
    %v1121 = vpop.f32.mrb[0].mxu0
    %v1122 = vpop.f32.mrb[0].mxu0
    %v1123 = vadd.f32 0.0, %v1122
    %v1124 = vpop.f32.mrb[0].mxu0
    %1125 = vmatprep.mubr.bf16.mxu0 0
    %1126 = vmatmul.mubr.bf16.gmra.mrb[0].mxu0 %v993
    %v1127 = vpop.f32.mrb[0].mxu0
    %v1128 = vadd.f32 0.0, %v1127
    %v1129 = vpop.f32.mrb[0].mxu0
    %v1130 = vpop.f32.mrb[0].mxu0
    %v1131 = vadd.f32 0.0, %v1130
    %v1132 = vpop.f32.mrb[0].mxu0
    %1133 = vmatprep.mubr.bf16.mxu0 0
    %1134 = vmatmul.mubr.bf16.gmra.mrb[0].mxu0 %v994
    %v1135 = vpop.f32.mrb[0].mxu0
    %v1136 = vadd.f32 0.0, %v1135
    %v1137 = vpop.f32.mrb[0].mxu0
    %v1138 = vpop.f32.mrb[0].mxu0
    %v1139 = vadd.f32 0.0, %v1138
    %v1140 = vpop.f32.mrb[0].mxu0
    %1141 = vmatprep.mubr.bf16.mxu0 0
    %1142 = vmatmul.mubr.bf16.gmra.mrb[0].mxu0 %v995
    %v1143 = vpop.f32.mrb[0].mxu0
    %v1144 = vadd.f32 0.0, %v1143
    %v1145 = vpop.f32.mrb[0].mxu0
    %v1146 = vpop.f32.mrb[0].mxu0
    %v1147 = vadd.f32 0.0, %v1146
    %v1148 = vpop.f32.mrb[0].mxu0
    %1149 = vmatprep.mubr.bf16.mxu0 0
    %1150 = vmatmul.mubr.bf16.gmra.mrb[0].mxu0 %v996
    %v1151 = vpop.f32.mrb[0].mxu0
    %v1152 = vadd.f32 0.0, %v1151
    %v1153 = vpop.f32.mrb[0].mxu0
    %v1154 = vpop.f32.mrb[0].mxu0
    %v1155 = vadd.f32 0.0, %v1154
    %v1156 = vpop.f32.mrb[0].mxu0
    %1157 = vdwg.mxu0
    %v1158 = vpack.c.bf16 %v1099, %v1096
    %v1159 = vpack.c.bf16 %v1107, %v1104
    %v1160 = vpack.c.bf16 %v1115, %v1112
    %v1161 = vpack.c.bf16 %v1123, %v1120
    %v1162 = vpack.c.bf16 %v1131, %v1128
    %v1163 = vpack.c.bf16 %v1139, %v1136
    %v1164 = vpack.c.bf16 %v1147, %v1144
    %v1165 = vpack.c.bf16 %v1155, %v1152
    %v1166 = vld [vmem:[%s10] sm:$0x1]
    %v1168 = vlaneseq
    %v1169 = vshrl.u32 %v1168, 7
    %v1170 = vsub.s32 0, %v1169
    %v1171 = vrot.slane %v1166, %v1170
    %1173 = vmatprep.subr.bf16.mxu0 0
    %1174 = vmatpush1.bf16.msra.mxu0 %v1158
    %1175 = vmatprep.subr.bf16.mxu0 0
    %1176 = vmatpush1.bf16.msra.mxu0 %v1159
    %1177 = vmatprep.subr.bf16.mxu0 0
    %1178 = vmatpush1.bf16.msra.mxu0 %v1160
    %1179 = vmatprep.subr.bf16.mxu0 0
    %1180 = vmatpush1.bf16.msra.mxu0 %v1161
    %1181 = vmatprep.subr.bf16.mxu0 0
    %1182 = vmatpush1.bf16.msra.mxu0 %v1162
    %1183 = vmatprep.subr.bf16.mxu0 0
    %1184 = vmatpush1.bf16.msra.mxu0 %v1163
    %1185 = vmatprep.subr.bf16.mxu0 0
    %1186 = vmatpush1.bf16.msra.mxu0 %v1164
    %1187 = vmatprep.subr.bf16.mxu0 0
    %1188 = vmatpush1.bf16.msra.mxu0 %v1165
    %1189 = vmatprep.subr.bf16.mxu0 0
    %1190 = vmatpush1.bf16.msra.mxu0 0
    %1191 = vmatprep.subr.bf16.mxu0 0
    %1192 = vmatpush1.bf16.msra.mxu0 0
    %1193 = vmatprep.subr.bf16.mxu0 0
    %1194 = vmatpush1.bf16.msra.mxu0 0
    %1195 = vmatprep.subr.bf16.mxu0 0
    %1196 = vmatpush1.bf16.msra.mxu0 0
    %1197 = vmatprep.subr.bf16.mxu0 0
    %1198 = vmatpush1.bf16.msra.mxu0 0
    %1199 = vmatprep.subr.bf16.mxu0 0
    %1200 = vmatpush1.bf16.msra.mxu0 0
    %1201 = vmatprep.subr.bf16.mxu0 0
    %1202 = vmatpush1.bf16.msra.mxu0 0
    %1203 = vmatprep.subr.bf16.mxu0 0
    %1204 = vmatpush1.bf16.msra.mxu0 0
    %1205 = vmatprep.mubr.bf16.mxu0 0
    %1206 = vmatmul.mubr.bf16.gmra.mrb[0].mxu0 %v218
    %v1207 = vpop.f32.mrb[0].mxu0
    %v1208 = vadd.f32 %v1171, %v1207
    %v1209 = vpop.f32.mrb[0].mxu0
    %v1210 = vpop.f32.mrb[0].mxu0
    %v1211 = vadd.f32 %v1171, %v1210
    %v1212 = vpop.f32.mrb[0].mxu0
    %1213 = vmatprep.mubr.bf16.mxu0 0
    %1214 = vmatmul.mubr.bf16.gmra.mrb[0].mxu0 %v219
    %v1215 = vpop.f32.mrb[0].mxu0
    %v1216 = vadd.f32 %v1171, %v1215
    %v1217 = vpop.f32.mrb[0].mxu0
    %v1218 = vpop.f32.mrb[0].mxu0
    %v1219 = vadd.f32 %v1171, %v1218
    %v1220 = vpop.f32.mrb[0].mxu0
    %1221 = vmatprep.mubr.bf16.mxu0 0
    %1222 = vmatmul.mubr.bf16.gmra.mrb[0].mxu0 %v220
    %v1223 = vpop.f32.mrb[0].mxu0
    %v1224 = vadd.f32 %v1171, %v1223
    %v1225 = vpop.f32.mrb[0].mxu0
    %v1226 = vpop.f32.mrb[0].mxu0
    %v1227 = vadd.f32 %v1171, %v1226
    %v1228 = vpop.f32.mrb[0].mxu0
    %1229 = vmatprep.mubr.bf16.mxu0 0
    %1230 = vmatmul.mubr.bf16.gmra.mrb[0].mxu0 %v221
    %v1231 = vpop.f32.mrb[0].mxu0
    %v1232 = vadd.f32 %v1171, %v1231
    %v1233 = vpop.f32.mrb[0].mxu0
    %v1234 = vpop.f32.mrb[0].mxu0
    %v1235 = vadd.f32 %v1171, %v1234
    %v1236 = vpop.f32.mrb[0].mxu0
    %1237 = vmatprep.mubr.bf16.mxu0 0
    %1238 = vmatmul.mubr.bf16.gmra.mrb[0].mxu0 %v222
    %v1239 = vpop.f32.mrb[0].mxu0
    %v1240 = vadd.f32 %v1171, %v1239
    %v1241 = vpop.f32.mrb[0].mxu0
    %v1242 = vpop.f32.mrb[0].mxu0
    %v1243 = vadd.f32 %v1171, %v1242
    %v1244 = vpop.f32.mrb[0].mxu0
    %1245 = vmatprep.mubr.bf16.mxu0 0
    %1246 = vmatmul.mubr.bf16.gmra.mrb[0].mxu0 %v223
    %v1247 = vpop.f32.mrb[0].mxu0
    %v1248 = vadd.f32 %v1171, %v1247
    %v1249 = vpop.f32.mrb[0].mxu0
    %v1250 = vpop.f32.mrb[0].mxu0
    %v1251 = vadd.f32 %v1171, %v1250
    %v1252 = vpop.f32.mrb[0].mxu0
    %1253 = vmatprep.mubr.bf16.mxu0 0
    %1254 = vmatmul.mubr.bf16.gmra.mrb[0].mxu0 %v224
    %v1255 = vpop.f32.mrb[0].mxu0
    %v1256 = vadd.f32 %v1171, %v1255
    %v1257 = vpop.f32.mrb[0].mxu0
    %v1258 = vpop.f32.mrb[0].mxu0
    %v1259 = vadd.f32 %v1171, %v1258
    %v1260 = vpop.f32.mrb[0].mxu0
    %1261 = vmatprep.mubr.bf16.mxu0 0
    %1262 = vmatmul.mubr.bf16.gmra.mrb[0].mxu0 %v225
    %v1263 = vpop.f32.mrb[0].mxu0
    %v1264 = vadd.f32 %v1171, %v1263
    %v1265 = vpop.f32.mrb[0].mxu0
    %v1266 = vpop.f32.mrb[0].mxu0
    %v1267 = vadd.f32 %v1171, %v1266
    %v1268 = vpop.f32.mrb[0].mxu0
    %1269 = vdwg.mxu0
    %v1270 = vmax.f32 %v1208, 0.0
    %v1271 = vmax.f32 %v1211, 0.0
    %v1272 = vmax.f32 %v1216, 0.0
    %v1273 = vmax.f32 %v1219, 0.0
    %v1274 = vmax.f32 %v1224, 0.0
    %v1275 = vmax.f32 %v1227, 0.0
    %v1276 = vmax.f32 %v1232, 0.0
    %v1277 = vmax.f32 %v1235, 0.0
    %v1278 = vmax.f32 %v1240, 0.0
    %v1279 = vmax.f32 %v1243, 0.0
    %v1280 = vmax.f32 %v1248, 0.0
    %v1281 = vmax.f32 %v1251, 0.0
    %v1282 = vmax.f32 %v1256, 0.0
    %v1283 = vmax.f32 %v1259, 0.0
    %v1284 = vmax.f32 %v1264, 0.0
    %v1285 = vmax.f32 %v1267, 0.0
    %v1286 = vpack.c.bf16 %v1271, %v1270
    %v1287 = vpack.c.bf16 %v1273, %v1272
    %v1288 = vpack.c.bf16 %v1275, %v1274
    %v1289 = vpack.c.bf16 %v1277, %v1276
    %v1290 = vpack.c.bf16 %v1279, %v1278
    %v1291 = vpack.c.bf16 %v1281, %v1280
    %v1292 = vpack.c.bf16 %v1283, %v1282
    %v1293 = vpack.c.bf16 %v1285, %v1284
    %v1294 = vld [vmem:[%s2] sm:$0xf]
    %1295 = vmatprep.subr.bf16.mxu0 0
    %1296 = vmatpush1.bf16.msra.mxu0 %v1286
    %1297 = vmatprep.subr.bf16.mxu0 0
    %1298 = vmatpush1.bf16.msra.mxu0 %v1287
    %1299 = vmatprep.subr.bf16.mxu0 0
    %1300 = vmatpush1.bf16.msra.mxu0 %v1288
    %1301 = vmatprep.subr.bf16.mxu0 0
    %1302 = vmatpush1.bf16.msra.mxu0 %v1289
    %1303 = vmatprep.subr.bf16.mxu0 0
    %1304 = vmatpush1.bf16.msra.mxu0 %v1290
    %1305 = vmatprep.subr.bf16.mxu0 0
    %1306 = vmatpush1.bf16.msra.mxu0 %v1291
    %1307 = vmatprep.subr.bf16.mxu0 0
    %1308 = vmatpush1.bf16.msra.mxu0 %v1292
    %1309 = vmatprep.subr.bf16.mxu0 0
    %1310 = vmatpush1.bf16.msra.mxu0 %v1293
    %1311 = vmatprep.subr.bf16.mxu0 0
    %1312 = vmatpush1.bf16.msra.mxu0 0
    %1313 = vmatprep.subr.bf16.mxu0 0
    %1314 = vmatpush1.bf16.msra.mxu0 0
    %1315 = vmatprep.subr.bf16.mxu0 0
    %1316 = vmatpush1.bf16.msra.mxu0 0
    %1317 = vmatprep.subr.bf16.mxu0 0
    %1318 = vmatpush1.bf16.msra.mxu0 0
    %1319 = vmatprep.subr.bf16.mxu0 0
    %1320 = vmatpush1.bf16.msra.mxu0 0
    %1321 = vmatprep.subr.bf16.mxu0 0
    %1322 = vmatpush1.bf16.msra.mxu0 0
    %1323 = vmatprep.subr.bf16.mxu0 0
    %1324 = vmatpush1.bf16.msra.mxu0 0
    %1325 = vmatprep.subr.bf16.mxu0 0
    %1326 = vmatpush1.bf16.msra.mxu0 0
    %1327 = vmatprep.mubr.bf16.mxu0 0
    %1328 = vmatmul.mubr.bf16.gmra.mrb[0].mxu0 %v1294
    %v1329 = vpop.f32.mrb[0].mxu0
    %v1330 = vadd.f32 0.0, %v1329
    %v1331 = vpop.f32.mrb[0].mxu0
    %v1332 = vpop.f32.mrb[0].mxu0
    %v1333 = vpop.f32.mrb[0].mxu0
    %1334 = vdwg.mxu0
    %v1335 = vld [vmem:[%s3] sm:$0xff]
    %1337 = vset.pattern.permute.xlu0 0
    %1338 = vperm.xlu0 %1337, %v1335
    %v1339 = vpop.permute.xlu0 %1338
    %v1341 = vmul.f32 %v1330, %v1339
    %v1342 = vpack.c.bf16 %v1341, %v1341
    %v1343 = vld [vmem:[#allocation11] sm:$0xf]
    %v1344 = vld [vmem:[#allocation11 + $0x4] sm:$0xf]
    %v1345 = vld [vmem:[#allocation11 + $0x8] sm:$0xf]
    %v1346 = vld [vmem:[#allocation11 + $0xc] sm:$0xf]
    %v1347 = vld [vmem:[#allocation11 + $0x10] sm:$0xf]
    %v1348 = vld [vmem:[#allocation11 + $0x14] sm:$0xf]
    %v1349 = vld [vmem:[#allocation11 + $0x18] sm:$0xf]
    %v1350 = vld [vmem:[#allocation11 + $0x1c] sm:$0xf]
    %v1351 = vld [vmem:[#allocation11 + $0x20] sm:$0xf]
    %v1352 = vld [vmem:[#allocation11 + $0x24] sm:$0xf]
    %v1353 = vld [vmem:[#allocation11 + $0x28] sm:$0xf]
    %v1354 = vld [vmem:[#allocation11 + $0x2c] sm:$0xf]
    %v1355 = vld [vmem:[#allocation11 + $0x30] sm:$0xf]
    %v1356 = vld [vmem:[#allocation11 + $0x34] sm:$0xf]
    %v1357 = vld [vmem:[#allocation11 + $0x38] sm:$0xf]
    %v1358 = vld [vmem:[#allocation11 + $0x3c] sm:$0xf]
    %v1359 = vld [vmem:[%s12] sm:$0x1]
    %v1361 = vlaneseq
    %v1362 = vshrl.u32 %v1361, 7
    %v1363 = vsub.s32 0, %v1362
    %v1364 = vrot.slane %v1359, %v1363
    %v1382 = vunpack.c.l.b16 %v1343
    %v1383 = vunpack.c.l.b16 %v1344
    %v1384 = vunpack.c.l.b16 %v1345
    %v1385 = vunpack.c.l.b16 %v1346
    %v1386 = vunpack.c.l.b16 %v1347
    %v1387 = vunpack.c.l.b16 %v1348
    %v1388 = vunpack.c.l.b16 %v1349
    %v1389 = vunpack.c.l.b16 %v1350
    %v1390 = vunpack.c.l.b16 %v1351
    %v1391 = vunpack.c.l.b16 %v1352
    %v1392 = vunpack.c.l.b16 %v1353
    %v1393 = vunpack.c.l.b16 %v1354
    %v1394 = vunpack.c.l.b16 %v1355
    %v1395 = vunpack.c.l.b16 %v1356
    %v1396 = vunpack.c.l.b16 %v1357
    %v1397 = vunpack.c.l.b16 %v1358
    %v1398 = vpack.c.b16 %v1383, %v1382
    %v1399 = vpack.c.b16 %v1385, %v1384
    %v1400 = vpack.c.b16 %v1387, %v1386
    %v1401 = vpack.c.b16 %v1389, %v1388
    %v1402 = vpack.c.b16 %v1391, %v1390
    %v1403 = vpack.c.b16 %v1393, %v1392
    %v1404 = vpack.c.b16 %v1395, %v1394
    %v1405 = vpack.c.b16 %v1397, %v1396
    %1414 = vmatprep.subr.bf16.mxu0 0
    %1415 = vmatpush1.bf16.msra.mxu0 %v1398
    %1416 = vmatprep.subr.bf16.mxu0 0
    %1417 = vmatpush1.bf16.msra.mxu0 %v1399
    %1418 = vmatprep.subr.bf16.mxu0 0
    %1419 = vmatpush1.bf16.msra.mxu0 %v1400
    %1420 = vmatprep.subr.bf16.mxu0 0
    %1421 = vmatpush1.bf16.msra.mxu0 %v1401
    %1422 = vmatprep.subr.bf16.mxu0 0
    %1423 = vmatpush1.bf16.msra.mxu0 %v1402
    %1424 = vmatprep.subr.bf16.mxu0 0
    %1425 = vmatpush1.bf16.msra.mxu0 %v1403
    %1426 = vmatprep.subr.bf16.mxu0 0
    %1427 = vmatpush1.bf16.msra.mxu0 %v1404
    %1428 = vmatprep.subr.bf16.mxu0 0
    %1429 = vmatpush1.bf16.msra.mxu0 %v1405
    %1430 = vmatprep.subr.bf16.mxu0 0
    %1431 = vmatpush1.bf16.msra.mxu0 0
    %1432 = vmatprep.subr.bf16.mxu0 0
    %1433 = vmatpush1.bf16.msra.mxu0 0
    %1434 = vmatprep.subr.bf16.mxu0 0
    %1435 = vmatpush1.bf16.msra.mxu0 0
    %1436 = vmatprep.subr.bf16.mxu0 0
    %1437 = vmatpush1.bf16.msra.mxu0 0
    %1438 = vmatprep.subr.bf16.mxu0 0
    %1439 = vmatpush1.bf16.msra.mxu0 0
    %1440 = vmatprep.subr.bf16.mxu0 0
    %1441 = vmatpush1.bf16.msra.mxu0 0
    %1442 = vmatprep.subr.bf16.mxu0 0
    %1443 = vmatpush1.bf16.msra.mxu0 0
    %1444 = vmatprep.subr.bf16.mxu0 0
    %1445 = vmatpush1.bf16.msra.mxu0 0
    %1446 = vmatprep.mubr.bf16.mxu0 0
    %1447 = vmatmul.mubr.bf16.gmra.mrb[0].mxu0 %v1342
    %v1448 = vpop.f32.mrb[0].mxu0
    %v1449 = vadd.f32 %v1364, %v1448
    %v1450 = vpop.f32.mrb[0].mxu0
    %v1451 = vpop.f32.mrb[0].mxu0
    %v1452 = vpop.f32.mrb[0].mxu0
    %1453 = vdwg.mxu0
    %v1454 = vmax.f32 %v1449, 0.0
    %v1455 = vpack.c.bf16 %v1454, %v1454
    %v1456 = vld [vmem:[#allocation13] sm:$0xf]
    %v1457 = vld [vmem:[#allocation13 + $0x4] sm:$0xf]
    %v1458 = vld [vmem:[#allocation13 + $0x8] sm:$0xf]
    %v1459 = vld [vmem:[#allocation13 + $0xc] sm:$0xf]
    %v1460 = vld [vmem:[#allocation13 + $0x10] sm:$0xf]
    %v1461 = vld [vmem:[#allocation13 + $0x14] sm:$0xf]
    %v1462 = vld [vmem:[#allocation13 + $0x18] sm:$0xf]
    %v1463 = vld [vmem:[#allocation13 + $0x1c] sm:$0xf]
    %v1464 = vld [vmem:[#allocation13 + $0x20] sm:$0xf]
    %v1465 = vld [vmem:[#allocation13 + $0x24] sm:$0xf]
    %v1466 = vld [vmem:[#allocation13 + $0x28] sm:$0xf]
    %v1467 = vld [vmem:[#allocation13 + $0x2c] sm:$0xf]
    %v1468 = vld [vmem:[#allocation13 + $0x30] sm:$0xf]
    %v1469 = vld [vmem:[#allocation13 + $0x34] sm:$0xf]
    %v1470 = vld [vmem:[#allocation13 + $0x38] sm:$0xf]
    %v1471 = vld [vmem:[#allocation13 + $0x3c] sm:$0xf]
    %v1472 = vld [vmem:[%s14] sm:$0x1]
    %v1474 = vlaneseq
    %v1475 = vshrl.u32 %v1474, 7
    %v1476 = vsub.s32 0, %v1475
    %v1477 = vrot.slane %v1472, %v1476
    %v1495 = vunpack.c.l.b16 %v1456
    %v1496 = vunpack.c.l.b16 %v1457
    %v1497 = vunpack.c.l.b16 %v1458
    %v1498 = vunpack.c.l.b16 %v1459
    %v1499 = vunpack.c.l.b16 %v1460
    %v1500 = vunpack.c.l.b16 %v1461
    %v1501 = vunpack.c.l.b16 %v1462
    %v1502 = vunpack.c.l.b16 %v1463
    %v1503 = vunpack.c.l.b16 %v1464
    %v1504 = vunpack.c.l.b16 %v1465
    %v1505 = vunpack.c.l.b16 %v1466
    %v1506 = vunpack.c.l.b16 %v1467
    %v1507 = vunpack.c.l.b16 %v1468
    %v1508 = vunpack.c.l.b16 %v1469
    %v1509 = vunpack.c.l.b16 %v1470
    %v1510 = vunpack.c.l.b16 %v1471
    %v1511 = vpack.c.b16 %v1496, %v1495
    %v1512 = vpack.c.b16 %v1498, %v1497
    %v1513 = vpack.c.b16 %v1500, %v1499
    %v1514 = vpack.c.b16 %v1502, %v1501
    %v1515 = vpack.c.b16 %v1504, %v1503
    %v1516 = vpack.c.b16 %v1506, %v1505
    %v1517 = vpack.c.b16 %v1508, %v1507
    %v1518 = vpack.c.b16 %v1510, %v1509
    %1527 = vmatprep.subr.bf16.mxu0 0
    %1528 = vmatpush1.bf16.msra.mxu0 %v1511
    %1529 = vmatprep.subr.bf16.mxu0 0
    %1530 = vmatpush1.bf16.msra.mxu0 %v1512
    %1531 = vmatprep.subr.bf16.mxu0 0
    %1532 = vmatpush1.bf16.msra.mxu0 %v1513
    %1533 = vmatprep.subr.bf16.mxu0 0
    %1534 = vmatpush1.bf16.msra.mxu0 %v1514
    %1535 = vmatprep.subr.bf16.mxu0 0
    %1536 = vmatpush1.bf16.msra.mxu0 %v1515
    %1537 = vmatprep.subr.bf16.mxu0 0
    %1538 = vmatpush1.bf16.msra.mxu0 %v1516
    %1539 = vmatprep.subr.bf16.mxu0 0
    %1540 = vmatpush1.bf16.msra.mxu0 %v1517
    %1541 = vmatprep.subr.bf16.mxu0 0
    %1542 = vmatpush1.bf16.msra.mxu0 %v1518
    %1543 = vmatprep.subr.bf16.mxu0 0
    %1544 = vmatpush1.bf16.msra.mxu0 0
    %1545 = vmatprep.subr.bf16.mxu0 0
    %1546 = vmatpush1.bf16.msra.mxu0 0
    %1547 = vmatprep.subr.bf16.mxu0 0
    %1548 = vmatpush1.bf16.msra.mxu0 0
    %1549 = vmatprep.subr.bf16.mxu0 0
    %1550 = vmatpush1.bf16.msra.mxu0 0
    %1551 = vmatprep.subr.bf16.mxu0 0
    %1552 = vmatpush1.bf16.msra.mxu0 0
    %1553 = vmatprep.subr.bf16.mxu0 0
    %1554 = vmatpush1.bf16.msra.mxu0 0
    %1555 = vmatprep.subr.bf16.mxu0 0
    %1556 = vmatpush1.bf16.msra.mxu0 0
    %1557 = vmatprep.subr.bf16.mxu0 0
    %1558 = vmatpush1.bf16.msra.mxu0 0
    %1559 = vmatprep.mubr.bf16.mxu0 0
    %1560 = vmatmul.mubr.bf16.gmra.mrb[0].mxu0 %v1455
    %v1561 = vpop.f32.mrb[0].mxu0
    %v1562 = vadd.f32 %v1477, %v1561
    %v1563 = vpop.f32.mrb[0].mxu0
    %v1564 = vpop.f32.mrb[0].mxu0
    %v1565 = vpop.f32.mrb[0].mxu0
    %1566 = vdwg.mxu0
    %v1567 = vlaneseq
    %v1568 = vand.u32 %v1567, 127
    %vm1569 = vcmp.lt.s32.totalorder %v1568, 4
    %v1570 = vsel %vm1569, %v1562, -inf
    %1571 = vmax.xlane.f32.xlu0 %v1570
    %v1572 = vpop.xlane.xlu0 %1571
    %v1573 = vsub.f32 %v1570, %v1572
    %v1574 = vmul.f32 %v1573, 1.442695
    %v1575 = vpow.pop %v1574
    %1576 = vadd.xlane.f32.xlu0 %v1575
    %v1577 = vpop.xlane.xlu0 %1576
    %v1578 = vlog2.pop %v1577
    %v1579 = vmul.f32 %v1578, 0.6931472
    %v1580 = vsub.f32 %v1573, %v1579
    %1581 = vst [vmem:[#allocation14] sm:$0xff] %v1580
    // Predicated region
    $region90: #{tpu_custom_call.1} parent=1 // pred_check
      _
    $region91: #{tpu_custom_call.1} parent=1 // pred_check_branch
      %1583 = sbr.rel (0) target = $region93
    $region92: #{tpu_custom_call.1} parent=1 // pred_region
      %s1585 = ssub.s32 128, 128
      %1586 = vsyncadd [#allocation4], %s1585
      %s1588 = sshll.u32 [#allocation14], 4
      %s1589 = int_to_ptr.vmem [resolvable:$true] %s1588
      %1591 = dma.vmem_to_hbm [thread:$0]  %s1589, 128, %s15, [#allocation4]
    $region93: #{tpu_custom_call.1} parent=1 // pred_fallthru
      _
    // Predicated region
    $region94: #{tpu_custom_call.1} parent=1 // pred_check
      _
    $region95: #{tpu_custom_call.1} parent=1 // pred_check_branch
      %1593 = sbr.rel (0) target = $region97
    $region96: #{tpu_custom_call.1} parent=1 // pred_region
      %1594 = dma.done [#allocation4], 128
    $region97: #{tpu_custom_call.1} parent=1 // pred_fallthru
      _
    %1595 = vsyncpa [#allocation3], 1
    %1596 = vsyncpa [#allocation6], 1
    %1597 = vsyncpa [#allocation9], 1
    %1598 = vsyncpa [#allocation12], 1
    %1599 = vsyncpa [#allocation4], 1

</llo_original>
